<compile_context>
chip_gen: v6e
topology: v6e:2x2x1
jax: 0.10.0
libtpu: 0.0.40
codegen_flags: <defaults>
</compile_context>

<pallas_src>
import functools

import jax
import jax.numpy as jnp
from jax.experimental import pallas as pl
from jax.experimental.pallas import tpu as pltpu


def _full_spec(shape):
    nd = len(shape)
    return pl.BlockSpec(shape, lambda i, _nd=nd: (0,) * _nd)


# ----------------------------------------------------------------------------
# Fused forward kernel
# ----------------------------------------------------------------------------
def _gatnet_kernel(h0_ref, wemb_ref, snorm_ref, bias_ref, sel_ref, rep_ref,
                   hmask_ref, bones_ref, w_ref, ael_ref, aer_ref,
                   scale_ref, shift_ref, vro_ref, bpred_ref, o_ref,
                   *, n_layers):
    neg_slope = jnp.float32(0.2)

    bias = bias_ref[...]     # (N, H*N)  additive edge mask: 0 edge, -1e30 non-edge
    sel = sel_ref[...]       # (N, H*N)  sel[r, h*N+s] = (r == s)
    rep = rep_ref[...]       # (H*N, N)  rep[h*N+s, s] = 1   (replicate z per head)
    hmask = hmask_ref[...]   # (H*N, D)  1 on the per-head diagonal feature block
    bones = bones_ref[...]   # (H*N, H*N) block-diagonal ones (per-head lane blocks)
    snorm = snorm_ref[...]   # (N, 1)

    # embedding_lin (Bayesian mean, bias=False); in_feat_dropout: eval -> id
    h = jnp.dot(h0_ref[...], wemb_ref[...], preferred_element_type=jnp.float32)

    for l in range(n_layers):          # static unroll; h stays in VMEM/vregs
        h_in = h
        z = jnp.dot(h, w_ref[l], preferred_element_type=jnp.float32)       # (N, D)

        # All-heads attention logits packed lane-dense: column h*N + src.
        # er[dst, h*N+s] = <z_dst(head h), a_r(h)>    (same for every s)
        er = jnp.dot(z, aer_ref[l], preferred_element_type=jnp.float32)
        # el_pre[r, h*N+s] = <z_r(head h), a_l(h)>    (same for every s)
        el_pre = jnp.dot(z, ael_ref[l], preferred_element_type=jnp.float32)
        # el_row[0, h*N+s] = <z_s(head h), a_l(h)>  -- src term, broadcast over dst
        el_row = jnp.sum(el_pre * sel, axis=0, keepdims=True)              # (1, H*N)
        # per-head unmasked row max (LeakyReLU is monotone) for a safe stabilizer
        max_el = jnp.max(el_pre, axis=0, keepdims=True)                    # (1, H*N)

        s = er + el_row
        s = jnp.where(s > 0, s, neg_slope * s)                             # LeakyReLU
        m = er + max_el
        m = jnp.where(m > 0, m, neg_slope * m)                             # >= max_src s
        p = jnp.exp(s + bias - m)                      # masked entries -> exactly 0
        denom = jnp.dot(p, bones, preferred_element_type=jnp.float32)      # (N, H*N)
        alpha = p / denom                              # edge softmax per (dst, head)

        # aggregation for all heads at once: alpha_packed @ block-diag(z_heads)
        z_blk = jnp.dot(rep, z, preferred_element_type=jnp.float32) * hmask  # (H*N, D)
        h_att = jnp.dot(alpha, z_blk, preferred_element_type=jnp.float32)    # (N, D)

        # graph_norm (* snorm_n) and batch_norm (eval) folded into scale/shift
        h_new = h_att * snorm * scale_ref[l] + shift_ref[l]
        # ELU (exp only evaluated on the non-positive branch)
        h_new = jnp.where(h_new > 0, h_new,
                          jnp.exp(jnp.minimum(h_new, 0.0)) - 1.0)
        # dropout: eval -> identity; simple additive residual
        h = h_new + h_in

    # linear_ro -> 'sum' readout -> linear_predict, with the two bias-free
    # linears folded on the host into one (D, 1) vector.
    hg = jnp.sum(h, axis=0, keepdims=True)                                  # (1, D)
    o_ref[...] = (jnp.dot(hg, vro_ref[...], preferred_element_type=jnp.float32)
                  + bpred_ref[0, 0])


# ----------------------------------------------------------------------------
# Host wrapper: fold constants / weights, one pallas_call
# ----------------------------------------------------------------------------
def gatnet_forward(h, adj, snorm_n, params):
    h = h.astype(jnp.float32)
    n = h.shape[0]
    num_heads = params["num_heads"]
    hidden = params["w_emb"].shape[1]
    d_head = hidden // num_heads
    hn = num_heads * n
    n_layers = len(params["layers"])
    eps = jnp.float32(1e-5)
    big = jnp.float32(1e30)

    # ---- host-side constants (tiny; computed once, outside the kernel) ----
    adj = adj.astype(jnp.float32)
    bias_packed = jnp.tile((adj - 1.0) * big, (1, num_heads))        # (N, H*N)
    eye_n = jnp.eye(n, dtype=jnp.float32)
    sel_mask = jnp.tile(eye_n, (1, num_heads))                       # (N, H*N)
    rep = jnp.tile(eye_n, (num_heads, 1))                            # (H*N, N)
    col_head = jnp.arange(hn) // n                                   # head of packed col
    feat_head = jnp.arange(hidden) // d_head                         # head of feature
    feat_k = jnp.arange(hidden) % d_head
    head_mask = (col_head[:, None] == feat_head[None, :]).astype(jnp.float32)
    block_ones = (col_head[:, None] == col_head[None, :]).astype(jnp.float32)

    def make_attn_selector(attn):  # (H, d_head) -> (D, H*N)
        vals = attn[col_head[None, :], feat_k[:, None]]              # (D, H*N)
        return jnp.where(feat_head[:, None] == col_head[None, :],
                         vals, 0.0).astype(jnp.float32)

    W_l, ael_l, aer_l, scale_l, shift_l = [], [], [], [], []
    for lp in params["layers"]:
        W_l.append(lp["W"])
        ael_l.append(make_attn_selector(lp["attn_l"]))
        aer_l.append(make_attn_selector(lp["attn_r"]))
        scale = lp["bn_gamma"] * jax.lax.rsqrt(lp["bn_var"] + eps)
        scale_l.append(scale)
        shift_l.append(lp["bn_beta"] - lp["bn_mean"] * scale)
    W_stack = jnp.stack(W_l)                                         # (L, D, D)
    ael_stack = jnp.stack(ael_l)                                     # (L, D, H*N)
    aer_stack = jnp.stack(aer_l)                                     # (L, D, H*N)
    scale_stack = jnp.stack(scale_l)                                 # (L, 1, D)
    shift_stack = jnp.stack(shift_l)                                 # (L, 1, D)

    # fold readout + predictor linears (no nonlinearity in between)
    v_ro = jnp.dot(params["w_ro"], params["w_pred"]).astype(jnp.float32)   # (D, 1)
    b_pred = params["b_pred"].reshape(1, 1).astype(jnp.float32)

    vmem_args = (h, params["w_emb"], snorm_n, bias_packed, sel_mask, rep,
                 head_mask, block_ones, W_stack, ael_stack, aer_stack,
                 scale_stack, shift_stack, v_ro)

    kern = functools.partial(_gatnet_kernel, n_layers=n_layers)
    in_specs = [_full_spec(a.shape) for a in vmem_args]
    in_specs.append(pl.BlockSpec(memory_space=pltpu.MemorySpace.SMEM))  # b_pred

    return pl.pallas_call(
        kern,
        out_shape=jax.ShapeDtypeStruct((1, 1), jnp.float32),
        grid=(1,),
        in_specs=in_specs,
        out_specs=_full_spec((1, 1)),
        compiler_params=pltpu.CompilerParams(
            dimension_semantics=("arbitrary",)),
    )(*vmem_args, b_pred)


# ----------------------------------------------------------------------------
# Deterministic parameter / input construction
# ----------------------------------------------------------------------------
def make_params(key, num_atom_type, hidden_dim, out_dim, num_heads, n_layers):
    d_head = hidden_dim // num_heads
    keys = jax.random.split(key, 4 + 3 * n_layers)
    params = {
        "num_heads": num_heads,
        "w_emb": jax.random.normal(keys[0], (num_atom_type, hidden_dim),
                                   jnp.float32) / jnp.sqrt(num_atom_type),
        "w_ro": jax.random.normal(keys[1], (hidden_dim, out_dim),
                                  jnp.float32) / jnp.sqrt(hidden_dim),
        "w_pred": jax.random.normal(keys[2], (out_dim, 1),
                                    jnp.float32) / jnp.sqrt(out_dim),
        "b_pred": jax.random.normal(keys[3], (1, 1), jnp.float32) * 0.1,
        "layers": [],
    }
    for l in range(n_layers):
        k0, k1, k2 = keys[4 + 3 * l: 7 + 3 * l]
        params["layers"].append({
            "W": jax.random.normal(k0, (hidden_dim, hidden_dim),
                                   jnp.float32) / jnp.sqrt(hidden_dim),
            "attn_l": jax.random.normal(k1, (num_heads, d_head),
                                        jnp.float32) / jnp.sqrt(d_head),
            "attn_r": jax.random.normal(k2, (num_heads, d_head),
                                        jnp.float32) / jnp.sqrt(d_head),
            # batch_norm eval-mode params / running stats
            "bn_gamma": jnp.ones((1, hidden_dim), jnp.float32),
            "bn_beta": jnp.zeros((1, hidden_dim), jnp.float32),
            "bn_mean": jnp.zeros((1, hidden_dim), jnp.float32),
            "bn_var": jnp.ones((1, hidden_dim), jnp.float32),
        })
    return params


if __name__ == "__main__":
    # small, forward-consistent shapes
    N = 32              # nodes in the (single) graph
    NUM_ATOM_TYPE = 16
    HIDDEN = 32
    OUT_DIM = 32
    HEADS = 4
    LAYERS = 2

    key = jax.random.PRNGKey(0)
    k_feat, k_edges, k_params = jax.random.split(key, 3)

    # node features: one-hot atom types (the Linear embedding consumes them)
    atom_types = jax.random.randint(k_feat, (N,), 0, NUM_ATOM_TYPE)
    h = jax.nn.one_hot(atom_types, NUM_ATOM_TYPE, dtype=jnp.float32)

    # graph: ring edges + a few random edges + self loops, adj[dst, src]
    src = jnp.arange(N)
    ring_dst = (src + 1) % N
    adj = jnp.zeros((N, N), jnp.float32)
    adj = adj.at[ring_dst, src].set(1.0)
    rand_dst = jax.random.randint(k_edges, (N,), 0, N)
    adj = adj.at[rand_dst, src].set(1.0)
    adj = jnp.minimum(adj + jnp.eye(N, dtype=jnp.float32), 1.0)

    # graph-size normalization for nodes
    snorm_n = jnp.full((N, 1), 1.0 / jnp.sqrt(N), jnp.float32)

    params = make_params(k_params, NUM_ATOM_TYPE, HIDDEN, OUT_DIM,
                         HEADS, LAYERS)

    out = gatnet_forward(h, adj, snorm_n, params)
    out = jax.block_until_ready(out)
    assert out.shape == (1, 1) and out.dtype == jnp.float32
    assert bool(jnp.all(jnp.isfinite(out)))
    print("KERNEL_OK")
</pallas_src>

<mosaic_0001>
module attributes {stable_mosaic.version = 11 : i64} {
  func.func @_gatnet_kernel(%arg0: i32, %arg1: memref<32x16xf32, #tpu.memory_space<vmem>>, %arg2: memref<16x32xf32, #tpu.memory_space<vmem>>, %arg3: memref<32x1xf32, #tpu.memory_space<vmem>>, %arg4: memref<32x128xf32, #tpu.memory_space<vmem>>, %arg5: memref<32x128xf32, #tpu.memory_space<vmem>>, %arg6: memref<128x32xf32, #tpu.memory_space<vmem>>, %arg7: memref<128x32xf32, #tpu.memory_space<vmem>>, %arg8: memref<128x128xf32, #tpu.memory_space<vmem>>, %arg9: memref<2x32x32xf32, #tpu.memory_space<vmem>>, %arg10: memref<2x32x128xf32, #tpu.memory_space<vmem>>, %arg11: memref<2x32x128xf32, #tpu.memory_space<vmem>>, %arg12: memref<2x1x32xf32, #tpu.memory_space<vmem>>, %arg13: memref<2x1x32xf32, #tpu.memory_space<vmem>>, %arg14: memref<32x1xf32, #tpu.memory_space<vmem>>, %arg15: memref<1x1xf32, #tpu.memory_space<smem>>, %arg16: memref<1x1xf32, #tpu.memory_space<vmem>>) attributes {dimension_semantics = [#tpu.dimension_semantics<arbitrary>], iteration_bounds = array<i64: 1>, scalar_prefetch = 0 : i64, scratch_operands = 0 : i64, tpu.core_type = #tpu.core_type<tc>, window_params = [{pipeline_mode = #tpu.pipeline_mode<synchronous>, transform_indices = @transform_0, window_bounds = array<i64: 32, 16>}, {pipeline_mode = #tpu.pipeline_mode<synchronous>, transform_indices = @transform_1, window_bounds = array<i64: 16, 32>}, {pipeline_mode = #tpu.pipeline_mode<synchronous>, transform_indices = @transform_2, window_bounds = array<i64: 32, 1>}, {pipeline_mode = #tpu.pipeline_mode<synchronous>, transform_indices = @transform_3, window_bounds = array<i64: 32, 128>}, {pipeline_mode = #tpu.pipeline_mode<synchronous>, transform_indices = @transform_4, window_bounds = array<i64: 32, 128>}, {pipeline_mode = #tpu.pipeline_mode<synchronous>, transform_indices = @transform_5, window_bounds = array<i64: 128, 32>}, {pipeline_mode = #tpu.pipeline_mode<synchronous>, transform_indices = @transform_6, window_bounds = array<i64: 128, 32>}, {pipeline_mode = #tpu.pipeline_mode<synchronous>, transform_indices = @transform_7, window_bounds = array<i64: 128, 128>}, {pipeline_mode = #tpu.pipeline_mode<synchronous>, transform_indices = @transform_8, window_bounds = array<i64: 2, 32, 32>}, {pipeline_mode = #tpu.pipeline_mode<synchronous>, transform_indices = @transform_9, window_bounds = array<i64: 2, 32, 128>}, {pipeline_mode = #tpu.pipeline_mode<synchronous>, transform_indices = @transform_10, window_bounds = array<i64: 2, 32, 128>}, {pipeline_mode = #tpu.pipeline_mode<synchronous>, transform_indices = @transform_11, window_bounds = array<i64: 2, 1, 32>}, {pipeline_mode = #tpu.pipeline_mode<synchronous>, transform_indices = @transform_12, window_bounds = array<i64: 2, 1, 32>}, {pipeline_mode = #tpu.pipeline_mode<synchronous>, transform_indices = @transform_13, window_bounds = array<i64: 32, 1>}, {transform_indices = @transform_14, window_bounds = array<i64: 1, 1>}, {pipeline_mode = #tpu.pipeline_mode<synchronous>, transform_indices = @transform_15, window_bounds = array<i64: 1, 1>}]} {
    %c0 = arith.constant 0 : index
    %c0_0 = arith.constant 0 : index
    %0 = vector.load %arg4[%c0, %c0_0] : memref<32x128xf32, #tpu.memory_space<vmem>>, vector<32x128xf32>
    %c0_1 = arith.constant 0 : index
    %c0_2 = arith.constant 0 : index
    %1 = vector.load %arg5[%c0_1, %c0_2] : memref<32x128xf32, #tpu.memory_space<vmem>>, vector<32x128xf32>
    %c0_3 = arith.constant 0 : index
    %c0_4 = arith.constant 0 : index
    %2 = vector.load %arg6[%c0_3, %c0_4] : memref<128x32xf32, #tpu.memory_space<vmem>>, vector<128x32xf32>
    %c0_5 = arith.constant 0 : index
    %c0_6 = arith.constant 0 : index
    %3 = vector.load %arg7[%c0_5, %c0_6] : memref<128x32xf32, #tpu.memory_space<vmem>>, vector<128x32xf32>
    %c0_7 = arith.constant 0 : index
    %c0_8 = arith.constant 0 : index
    %4 = vector.load %arg8[%c0_7, %c0_8] : memref<128x128xf32, #tpu.memory_space<vmem>>, vector<128x128xf32>
    %c0_9 = arith.constant 0 : index
    %c0_10 = arith.constant 0 : index
    %5 = vector.load %arg3[%c0_9, %c0_10] : memref<32x1xf32, #tpu.memory_space<vmem>>, vector<32x1xf32>
    %c0_11 = arith.constant 0 : index
    %c0_12 = arith.constant 0 : index
    %6 = vector.load %arg1[%c0_11, %c0_12] : memref<32x16xf32, #tpu.memory_space<vmem>>, vector<32x16xf32>
    %c0_13 = arith.constant 0 : index
    %c0_14 = arith.constant 0 : index
    %7 = vector.load %arg2[%c0_13, %c0_14] : memref<16x32xf32, #tpu.memory_space<vmem>>, vector<16x32xf32>
    %cst = arith.constant dense<0.000000e+00> : vector<32x32xf32>
    %8 = tpu.matmul %6, %7, %cst {dimension_numbers = #tpu.dot_dimension_numbers<[1], [0], [0], [1], [0, 0, 1, 1], [], []>} : vector<32x16xf32>, vector<16x32xf32>, vector<32x32xf32> -> vector<32x32xf32>
    %c0_15 = arith.constant 0 : index
    %c0_16 = arith.constant 0 : index
    %c0_17 = arith.constant 0 : index
    %9 = vector.load %arg9[%c0_15, %c0_16, %c0_17] : memref<2x32x32xf32, #tpu.memory_space<vmem>>, vector<1x32x32xf32>
    %10 = vector.shape_cast %9 : vector<1x32x32xf32> to vector<32x32xf32>
    %cst_18 = arith.constant dense<0.000000e+00> : vector<32x32xf32>
    %11 = tpu.matmul %8, %10, %cst_18 {dimension_numbers = #tpu.dot_dimension_numbers<[1], [0], [0], [1], [0, 0, 1, 1], [], []>} : vector<32x32xf32>, vector<32x32xf32>, vector<32x32xf32> -> vector<32x32xf32>
    %c0_19 = arith.constant 0 : index
    %c0_20 = arith.constant 0 : index
    %c0_21 = arith.constant 0 : index
    %12 = vector.load %arg11[%c0_19, %c0_20, %c0_21] : memref<2x32x128xf32, #tpu.memory_space<vmem>>, vector<1x32x128xf32>
    %13 = vector.shape_cast %12 : vector<1x32x128xf32> to vector<32x128xf32>
    %cst_22 = arith.constant dense<0.000000e+00> : vector<32x128xf32>
    %14 = tpu.matmul %11, %13, %cst_22 {dimension_numbers = #tpu.dot_dimension_numbers<[1], [0], [0], [1], [0, 0, 1, 1], [], []>} : vector<32x32xf32>, vector<32x128xf32>, vector<32x128xf32> -> vector<32x128xf32>
    %c0_23 = arith.constant 0 : index
    %c0_24 = arith.constant 0 : index
    %c0_25 = arith.constant 0 : index
    %15 = vector.load %arg10[%c0_23, %c0_24, %c0_25] : memref<2x32x128xf32, #tpu.memory_space<vmem>>, vector<1x32x128xf32>
    %16 = vector.shape_cast %15 : vector<1x32x128xf32> to vector<32x128xf32>
    %cst_26 = arith.constant dense<0.000000e+00> : vector<32x128xf32>
    %17 = tpu.matmul %11, %16, %cst_26 {dimension_numbers = #tpu.dot_dimension_numbers<[1], [0], [0], [1], [0, 0, 1, 1], [], []>} : vector<32x32xf32>, vector<32x128xf32>, vector<32x128xf32> -> vector<32x128xf32>
    %18 = arith.mulf %17, %1 : vector<32x128xf32>
    %cst_27 = arith.constant dense<0.000000e+00> : vector<128xf32>
    %19 = vector.multi_reduction <add>, %18, %cst_27 [0] : vector<32x128xf32> to vector<128xf32>
    %20 = vector.shape_cast %19 : vector<128xf32> to vector<1x128xf32>
    %cst_28 = arith.constant dense<0xFF800000> : vector<128xf32>
    %21 = vector.multi_reduction <maximumf>, %17, %cst_28 [0] : vector<32x128xf32> to vector<128xf32>
    %22 = vector.shape_cast %21 : vector<128xf32> to vector<1x128xf32>
    %23 = vector.broadcast %20 : vector<1x128xf32> to vector<32x128xf32>
    %24 = arith.addf %14, %23 : vector<32x128xf32>
    %cst_29 = arith.constant 0.000000e+00 : f32
    %25 = vector.broadcast %cst_29 : f32 to vector<32x128xf32>
    %26 = arith.cmpf ogt, %24, %25 : vector<32x128xf32>
    %cst_30 = arith.constant 2.000000e-01 : f32
    %27 = vector.broadcast %cst_30 : f32 to vector<32x128xf32>
    %28 = arith.mulf %27, %24 : vector<32x128xf32>
    %29 = arith.select %26, %24, %28 : vector<32x128xi1>, vector<32x128xf32>
    %30 = vector.broadcast %22 : vector<1x128xf32> to vector<32x128xf32>
    %31 = arith.addf %14, %30 : vector<32x128xf32>
    %cst_31 = arith.constant 0.000000e+00 : f32
    %32 = vector.broadcast %cst_31 : f32 to vector<32x128xf32>
    %33 = arith.cmpf ogt, %31, %32 : vector<32x128xf32>
    %cst_32 = arith.constant 2.000000e-01 : f32
    %34 = vector.broadcast %cst_32 : f32 to vector<32x128xf32>
    %35 = arith.mulf %34, %31 : vector<32x128xf32>
    %36 = arith.select %33, %31, %35 : vector<32x128xi1>, vector<32x128xf32>
    %37 = arith.addf %29, %0 : vector<32x128xf32>
    %38 = arith.subf %37, %36 : vector<32x128xf32>
    %39 = math.exp %38 : vector<32x128xf32>
    %cst_33 = arith.constant dense<0.000000e+00> : vector<32x128xf32>
    %40 = tpu.matmul %39, %4, %cst_33 {dimension_numbers = #tpu.dot_dimension_numbers<[1], [0], [0], [1], [0, 0, 1, 1], [], []>} : vector<32x128xf32>, vector<128x128xf32>, vector<32x128xf32> -> vector<32x128xf32>
    %41 = arith.divf %39, %40 : vector<32x128xf32>
    %cst_34 = arith.constant dense<0.000000e+00> : vector<128x32xf32>
    %42 = tpu.matmul %2, %11, %cst_34 {dimension_numbers = #tpu.dot_dimension_numbers<[1], [0], [0], [1], [0, 0, 1, 1], [], []>} : vector<128x32xf32>, vector<32x32xf32>, vector<128x32xf32> -> vector<128x32xf32>
    %43 = arith.mulf %42, %3 : vector<128x32xf32>
    %cst_35 = arith.constant dense<0.000000e+00> : vector<32x32xf32>
    %44 = tpu.matmul %41, %43, %cst_35 {dimension_numbers = #tpu.dot_dimension_numbers<[1], [0], [0], [1], [0, 0, 1, 1], [], []>} : vector<32x128xf32>, vector<128x32xf32>, vector<32x32xf32> -> vector<32x32xf32>
    %45 = vector.broadcast %5 : vector<32x1xf32> to vector<32x32xf32>
    %46 = arith.mulf %44, %45 : vector<32x32xf32>
    %c0_36 = arith.constant 0 : index
    %c0_37 = arith.constant 0 : index
    %c0_38 = arith.constant 0 : index
    %47 = vector.load %arg12[%c0_36, %c0_37, %c0_38] : memref<2x1x32xf32, #tpu.memory_space<vmem>>, vector<1x1x32xf32>
    %48 = vector.shape_cast %47 : vector<1x1x32xf32> to vector<1x32xf32>
    %49 = vector.broadcast %48 : vector<1x32xf32> to vector<32x32xf32>
    %50 = arith.mulf %46, %49 : vector<32x32xf32>
    %c0_39 = arith.constant 0 : index
    %c0_40 = arith.constant 0 : index
    %c0_41 = arith.constant 0 : index
    %51 = vector.load %arg13[%c0_39, %c0_40, %c0_41] : memref<2x1x32xf32, #tpu.memory_space<vmem>>, vector<1x1x32xf32>
    %52 = vector.shape_cast %51 : vector<1x1x32xf32> to vector<1x32xf32>
    %53 = vector.broadcast %52 : vector<1x32xf32> to vector<32x32xf32>
    %54 = arith.addf %50, %53 : vector<32x32xf32>
    %cst_42 = arith.constant 0.000000e+00 : f32
    %55 = vector.broadcast %cst_42 : f32 to vector<32x32xf32>
    %56 = arith.cmpf ogt, %54, %55 : vector<32x32xf32>
    %cst_43 = arith.constant 0.000000e+00 : f32
    %57 = vector.broadcast %cst_43 : f32 to vector<32x32xf32>
    %58 = arith.minimumf %54, %57 : vector<32x32xf32>
    %59 = math.exp %58 : vector<32x32xf32>
    %cst_44 = arith.constant 1.000000e+00 : f32
    %60 = vector.broadcast %cst_44 : f32 to vector<32x32xf32>
    %61 = arith.subf %59, %60 : vector<32x32xf32>
    %62 = arith.select %56, %54, %61 : vector<32x32xi1>, vector<32x32xf32>
    %63 = arith.addf %62, %8 : vector<32x32xf32>
    %c1 = arith.constant 1 : index
    %c0_45 = arith.constant 0 : index
    %c0_46 = arith.constant 0 : index
    %64 = vector.load %arg9[%c1, %c0_45, %c0_46] : memref<2x32x32xf32, #tpu.memory_space<vmem>>, vector<1x32x32xf32>
    %65 = vector.shape_cast %64 : vector<1x32x32xf32> to vector<32x32xf32>
    %cst_47 = arith.constant dense<0.000000e+00> : vector<32x32xf32>
    %66 = tpu.matmul %63, %65, %cst_47 {dimension_numbers = #tpu.dot_dimension_numbers<[1], [0], [0], [1], [0, 0, 1, 1], [], []>} : vector<32x32xf32>, vector<32x32xf32>, vector<32x32xf32> -> vector<32x32xf32>
    %c1_48 = arith.constant 1 : index
    %c0_49 = arith.constant 0 : index
    %c0_50 = arith.constant 0 : index
    %67 = vector.load %arg11[%c1_48, %c0_49, %c0_50] : memref<2x32x128xf32, #tpu.memory_space<vmem>>, vector<1x32x128xf32>
    %68 = vector.shape_cast %67 : vector<1x32x128xf32> to vector<32x128xf32>
    %cst_51 = arith.constant dense<0.000000e+00> : vector<32x128xf32>
    %69 = tpu.matmul %66, %68, %cst_51 {dimension_numbers = #tpu.dot_dimension_numbers<[1], [0], [0], [1], [0, 0, 1, 1], [], []>} : vector<32x32xf32>, vector<32x128xf32>, vector<32x128xf32> -> vector<32x128xf32>
    %c1_52 = arith.constant 1 : index
    %c0_53 = arith.constant 0 : index
    %c0_54 = arith.constant 0 : index
    %70 = vector.load %arg10[%c1_52, %c0_53, %c0_54] : memref<2x32x128xf32, #tpu.memory_space<vmem>>, vector<1x32x128xf32>
    %71 = vector.shape_cast %70 : vector<1x32x128xf32> to vector<32x128xf32>
    %cst_55 = arith.constant dense<0.000000e+00> : vector<32x128xf32>
    %72 = tpu.matmul %66, %71, %cst_55 {dimension_numbers = #tpu.dot_dimension_numbers<[1], [0], [0], [1], [0, 0, 1, 1], [], []>} : vector<32x32xf32>, vector<32x128xf32>, vector<32x128xf32> -> vector<32x128xf32>
    %73 = arith.mulf %72, %1 : vector<32x128xf32>
    %cst_56 = arith.constant dense<0.000000e+00> : vector<128xf32>
    %74 = vector.multi_reduction <add>, %73, %cst_56 [0] : vector<32x128xf32> to vector<128xf32>
    %75 = vector.shape_cast %74 : vector<128xf32> to vector<1x128xf32>
    %cst_57 = arith.constant dense<0xFF800000> : vector<128xf32>
    %76 = vector.multi_reduction <maximumf>, %72, %cst_57 [0] : vector<32x128xf32> to vector<128xf32>
    %77 = vector.shape_cast %76 : vector<128xf32> to vector<1x128xf32>
    %78 = vector.broadcast %75 : vector<1x128xf32> to vector<32x128xf32>
    %79 = arith.addf %69, %78 : vector<32x128xf32>
    %cst_58 = arith.constant 0.000000e+00 : f32
    %80 = vector.broadcast %cst_58 : f32 to vector<32x128xf32>
    %81 = arith.cmpf ogt, %79, %80 : vector<32x128xf32>
    %cst_59 = arith.constant 2.000000e-01 : f32
    %82 = vector.broadcast %cst_59 : f32 to vector<32x128xf32>
    %83 = arith.mulf %82, %79 : vector<32x128xf32>
    %84 = arith.select %81, %79, %83 : vector<32x128xi1>, vector<32x128xf32>
    %85 = vector.broadcast %77 : vector<1x128xf32> to vector<32x128xf32>
    %86 = arith.addf %69, %85 : vector<32x128xf32>
    %cst_60 = arith.constant 0.000000e+00 : f32
    %87 = vector.broadcast %cst_60 : f32 to vector<32x128xf32>
    %88 = arith.cmpf ogt, %86, %87 : vector<32x128xf32>
    %cst_61 = arith.constant 2.000000e-01 : f32
    %89 = vector.broadcast %cst_61 : f32 to vector<32x128xf32>
    %90 = arith.mulf %89, %86 : vector<32x128xf32>
    %91 = arith.select %88, %86, %90 : vector<32x128xi1>, vector<32x128xf32>
    %92 = arith.addf %84, %0 : vector<32x128xf32>
    %93 = arith.subf %92, %91 : vector<32x128xf32>
    %94 = math.exp %93 : vector<32x128xf32>
    %cst_62 = arith.constant dense<0.000000e+00> : vector<32x128xf32>
    %95 = tpu.matmul %94, %4, %cst_62 {dimension_numbers = #tpu.dot_dimension_numbers<[1], [0], [0], [1], [0, 0, 1, 1], [], []>} : vector<32x128xf32>, vector<128x128xf32>, vector<32x128xf32> -> vector<32x128xf32>
    %96 = arith.divf %94, %95 : vector<32x128xf32>
    %cst_63 = arith.constant dense<0.000000e+00> : vector<128x32xf32>
    %97 = tpu.matmul %2, %66, %cst_63 {dimension_numbers = #tpu.dot_dimension_numbers<[1], [0], [0], [1], [0, 0, 1, 1], [], []>} : vector<128x32xf32>, vector<32x32xf32>, vector<128x32xf32> -> vector<128x32xf32>
    %98 = arith.mulf %97, %3 : vector<128x32xf32>
    %cst_64 = arith.constant dense<0.000000e+00> : vector<32x32xf32>
    %99 = tpu.matmul %96, %98, %cst_64 {dimension_numbers = #tpu.dot_dimension_numbers<[1], [0], [0], [1], [0, 0, 1, 1], [], []>} : vector<32x128xf32>, vector<128x32xf32>, vector<32x32xf32> -> vector<32x32xf32>
    %100 = vector.broadcast %5 : vector<32x1xf32> to vector<32x32xf32>
    %101 = arith.mulf %99, %100 : vector<32x32xf32>
    %c1_65 = arith.constant 1 : index
    %c0_66 = arith.constant 0 : index
    %c0_67 = arith.constant 0 : index
    %102 = vector.load %arg12[%c1_65, %c0_66, %c0_67] : memref<2x1x32xf32, #tpu.memory_space<vmem>>, vector<1x1x32xf32>
    %103 = vector.shape_cast %102 : vector<1x1x32xf32> to vector<1x32xf32>
    %104 = vector.broadcast %103 : vector<1x32xf32> to vector<32x32xf32>
    %105 = arith.mulf %101, %104 : vector<32x32xf32>
    %c1_68 = arith.constant 1 : index
    %c0_69 = arith.constant 0 : index
    %c0_70 = arith.constant 0 : index
    %106 = vector.load %arg13[%c1_68, %c0_69, %c0_70] : memref<2x1x32xf32, #tpu.memory_space<vmem>>, vector<1x1x32xf32>
    %107 = vector.shape_cast %106 : vector<1x1x32xf32> to vector<1x32xf32>
    %108 = vector.broadcast %107 : vector<1x32xf32> to vector<32x32xf32>
    %109 = arith.addf %105, %108 : vector<32x32xf32>
    %cst_71 = arith.constant 0.000000e+00 : f32
    %110 = vector.broadcast %cst_71 : f32 to vector<32x32xf32>
    %111 = arith.cmpf ogt, %109, %110 : vector<32x32xf32>
    %cst_72 = arith.constant 0.000000e+00 : f32
    %112 = vector.broadcast %cst_72 : f32 to vector<32x32xf32>
    %113 = arith.minimumf %109, %112 : vector<32x32xf32>
    %114 = math.exp %113 : vector<32x32xf32>
    %cst_73 = arith.constant 1.000000e+00 : f32
    %115 = vector.broadcast %cst_73 : f32 to vector<32x32xf32>
    %116 = arith.subf %114, %115 : vector<32x32xf32>
    %117 = arith.select %111, %109, %116 : vector<32x32xi1>, vector<32x32xf32>
    %118 = arith.addf %117, %63 : vector<32x32xf32>
    %cst_74 = arith.constant dense<0.000000e+00> : vector<32xf32>
    %119 = vector.multi_reduction <add>, %118, %cst_74 [0] : vector<32x32xf32> to vector<32xf32>
    %120 = vector.shape_cast %119 : vector<32xf32> to vector<1x32xf32>
    %c0_75 = arith.constant 0 : index
    %c0_76 = arith.constant 0 : index
    %121 = vector.load %arg14[%c0_75, %c0_76] : memref<32x1xf32, #tpu.memory_space<vmem>>, vector<32x1xf32>
    %cst_77 = arith.constant dense<0.000000e+00> : vector<1x1xf32>
    %122 = tpu.matmul %120, %121, %cst_77 {dimension_numbers = #tpu.dot_dimension_numbers<[1], [0], [0], [1], [0, 0, 1, 1], [], []>} : vector<1x32xf32>, vector<32x1xf32>, vector<1x1xf32> -> vector<1x1xf32>
    %c0_78 = arith.constant 0 : index
    %c0_79 = arith.constant 0 : index
    %123 = memref.load %arg15[%c0_78, %c0_79] : memref<1x1xf32, #tpu.memory_space<smem>>
    %124 = vector.broadcast %123 : f32 to vector<1x1xf32>
    %125 = arith.addf %122, %124 : vector<1x1xf32>
    %c0_80 = arith.constant 0 : index
    %c0_81 = arith.constant 0 : index
    %126 = vector.load %arg16[%c0_80, %c0_81] : memref<1x1xf32, #tpu.memory_space<vmem>>, vector<1x1xf32>
    tpu.vector_store %arg16[%c0_80, %c0_81], %125 {strides = array<i32>} : memref<1x1xf32, #tpu.memory_space<vmem>>, vector<1x1xf32>,
    return
  }
  func.func @transform_0(%arg0: i32) -> (i32, i32) {
    %c0_i32 = arith.constant 0 : i32
    %c0_i32_0 = arith.constant 0 : i32
    %c0_i32_1 = arith.constant 0 : i32
    return %c0_i32, %c0_i32_0 : i32, i32
  }
  func.func @transform_1(%arg0: i32) -> (i32, i32) {
    %c0_i32 = arith.constant 0 : i32
    %c0_i32_0 = arith.constant 0 : i32
    %c0_i32_1 = arith.constant 0 : i32
    return %c0_i32, %c0_i32_0 : i32, i32
  }
  func.func @transform_2(%arg0: i32) -> (i32, i32) {
    %c0_i32 = arith.constant 0 : i32
    %c0_i32_0 = arith.constant 0 : i32
    %c0_i32_1 = arith.constant 0 : i32
    return %c0_i32, %c0_i32_0 : i32, i32
  }
  func.func @transform_3(%arg0: i32) -> (i32, i32) {
    %c0_i32 = arith.constant 0 : i32
    %c0_i32_0 = arith.constant 0 : i32
    %c0_i32_1 = arith.constant 0 : i32
    return %c0_i32, %c0_i32_0 : i32, i32
  }
  func.func @transform_4(%arg0: i32) -> (i32, i32) {
    %c0_i32 = arith.constant 0 : i32
    %c0_i32_0 = arith.constant 0 : i32
    %c0_i32_1 = arith.constant 0 : i32
    return %c0_i32, %c0_i32_0 : i32, i32
  }
  func.func @transform_5(%arg0: i32) -> (i32, i32) {
    %c0_i32 = arith.constant 0 : i32
    %c0_i32_0 = arith.constant 0 : i32
    %c0_i32_1 = arith.constant 0 : i32
    return %c0_i32, %c0_i32_0 : i32, i32
  }
  func.func @transform_6(%arg0: i32) -> (i32, i32) {
    %c0_i32 = arith.constant 0 : i32
    %c0_i32_0 = arith.constant 0 : i32
    %c0_i32_1 = arith.constant 0 : i32
    return %c0_i32, %c0_i32_0 : i32, i32
  }
  func.func @transform_7(%arg0: i32) -> (i32, i32) {
    %c0_i32 = arith.constant 0 : i32
    %c0_i32_0 = arith.constant 0 : i32
    %c0_i32_1 = arith.constant 0 : i32
    return %c0_i32, %c0_i32_0 : i32, i32
  }
  func.func @transform_8(%arg0: i32) -> (i32, i32, i32) {
    %c0_i32 = arith.constant 0 : i32
    %c0_i32_0 = arith.constant 0 : i32
    %c0_i32_1 = arith.constant 0 : i32
    %c0_i32_2 = arith.constant 0 : i32
    return %c0_i32, %c0_i32_0, %c0_i32_1 : i32, i32, i32
  }
  func.func @transform_9(%arg0: i32) -> (i32, i32, i32) {
    %c0_i32 = arith.constant 0 : i32
    %c0_i32_0 = arith.constant 0 : i32
    %c0_i32_1 = arith.constant 0 : i32
    %c0_i32_2 = arith.constant 0 : i32
    return %c0_i32, %c0_i32_0, %c0_i32_1 : i32, i32, i32
  }
  func.func @transform_10(%arg0: i32) -> (i32, i32, i32) {
    %c0_i32 = arith.constant 0 : i32
    %c0_i32_0 = arith.constant 0 : i32
    %c0_i32_1 = arith.constant 0 : i32
    %c0_i32_2 = arith.constant 0 : i32
    return %c0_i32, %c0_i32_0, %c0_i32_1 : i32, i32, i32
  }
  func.func @transform_11(%arg0: i32) -> (i32, i32, i32) {
    %c0_i32 = arith.constant 0 : i32
    %c0_i32_0 = arith.constant 0 : i32
    %c0_i32_1 = arith.constant 0 : i32
    %c0_i32_2 = arith.constant 0 : i32
    return %c0_i32, %c0_i32_0, %c0_i32_1 : i32, i32, i32
  }
  func.func @transform_12(%arg0: i32) -> (i32, i32, i32) {
    %c0_i32 = arith.constant 0 : i32
    %c0_i32_0 = arith.constant 0 : i32
    %c0_i32_1 = arith.constant 0 : i32
    %c0_i32_2 = arith.constant 0 : i32
    return %c0_i32, %c0_i32_0, %c0_i32_1 : i32, i32, i32
  }
  func.func @transform_13(%arg0: i32) -> (i32, i32) {
    %c0_i32 = arith.constant 0 : i32
    %c0_i32_0 = arith.constant 0 : i32
    %c0_i32_1 = arith.constant 0 : i32
    return %c0_i32, %c0_i32_0 : i32, i32
  }
  func.func @transform_14(%arg0: i32) -> (i32, i32) {
    %c0_i32 = arith.constant 0 : i32
    %c0_i32_0 = arith.constant 0 : i32
    %c0_i32_1 = arith.constant 0 : i32
    return %c0_i32, %c0_i32_0 : i32, i32
  }
  func.func @transform_15(%arg0: i32) -> (i32, i32) {
    %c0_i32 = arith.constant 0 : i32
    %c0_i32_0 = arith.constant 0 : i32
    %c0_i32_1 = arith.constant 0 : i32
    return %c0_i32, %c0_i32_0 : i32, i32
  }
}

</mosaic_0001>

<llo_original>
// kernel: tpu_custom_call.1
$region0: #{tpu_custom_call.1}
  #allocation0 [shape = 'u32[]', space=smem, size = 0x4, offset = 0x4, fixed_abs, tag = 'smem constant byte address 0x4 - core index']
  #allocation1 [shape = 'u32[144,128]{1,0:T(1,128)}', space=vmem, size = 0x12000, scoped, tag = 'internal scratch']
  #allocation2 [shape = 'f32[1,1]{1,0:T(1,128)S(6)}', space=smem, size = 0x200, scoped, tag = 'scoped memory for tpu_custom_call.1']
  %s0 = inlined_call_operand.vmem [shape: f32[32,16], index: 0, kind: input, shape index: {}]
  %s1 = inlined_call_operand.vmem [shape: f32[16,32], index: 1, kind: input, shape index: {}]
  %s2 = inlined_call_operand.vmem [shape: f32[32,1], index: 2, kind: input, shape index: {}]
  %s3 = inlined_call_operand.vmem [shape: f32[32,128], index: 3, kind: input, shape index: {}]
  %s4 = inlined_call_operand.vmem [shape: f32[32,128], index: 4, kind: input, shape index: {}]
  %s5 = inlined_call_operand.vmem [shape: f32[128,32], index: 5, kind: input, shape index: {}]
  %s6 = inlined_call_operand.vmem [shape: f32[128,32], index: 6, kind: input, shape index: {}]
  %s7 = inlined_call_operand.vmem [shape: f32[128,128], index: 7, kind: input, shape index: {}]
  %s8 = inlined_call_operand.vmem [shape: f32[2,32,32], index: 8, kind: input, shape index: {}]
  %s9 = inlined_call_operand.vmem [shape: f32[2,32,128], index: 9, kind: input, shape index: {}]
  %s10 = inlined_call_operand.vmem [shape: f32[2,32,128], index: 10, kind: input, shape index: {}]
  %s11 = inlined_call_operand.vmem [shape: f32[2,1,32], index: 11, kind: input, shape index: {}]
  %s12 = inlined_call_operand.vmem [shape: f32[2,1,32], index: 12, kind: input, shape index: {}]
  %s13 = inlined_call_operand.vmem [shape: f32[32,1], index: 13, kind: input, shape index: {}]
  %s14 = inlined_call_operand.<no memory space> [shape: f32[1,1], index: 14, kind: input, shape index: {}]
  %s15 = inlined_call_operand.hbm [shape: f32[1,1], index: 15, kind: output, shape index: {}]
  %s16 = sld [smem:[#allocation0]]
  $region70: #{tpu_custom_call.1} parent=0
    _
  %s18 = ssub.s32 1, %s16
  %s19 = scalar_select 0, %s18, %s16
  %20 = sst [smem:[#allocation2]] %s14
  $region1: #{tpu_custom_call.1} parent=0
    #allocation3 [shape = 'u8[512]{0}', space=vmem, size = 0x400, scoped, tag = 'output window, operand 0, single buffered']
    #allocation4 [shape = 's32[1]{0}', space=sflag, size = 0x4, scoped, tag = 'scoped memory for tpu_custom_call.1']
    %21 = vsyncpa [#allocation4], 0
    // Predicated region
    $region2: #{tpu_custom_call.1} parent=1 // pred_check
      _
    $region3: #{tpu_custom_call.1} parent=1 // pred_check_branch
      %23 = sbr.rel (0) target = $region5
    $region4: #{tpu_custom_call.1} parent=1 // pred_region
      _
    $region5: #{tpu_custom_call.1} parent=1 // pred_fallthru
      _
    // Predicated region
    $region6: #{tpu_custom_call.1} parent=1 // pred_check
      _
    $region7: #{tpu_custom_call.1} parent=1 // pred_check_branch
      %25 = sbr.rel (0) target = $region9
    $region8: #{tpu_custom_call.1} parent=1 // pred_region
      _
    $region9: #{tpu_custom_call.1} parent=1 // pred_fallthru
      _
    // Predicated region
    $region10: #{tpu_custom_call.1} parent=1 // pred_check
      _
    $region11: #{tpu_custom_call.1} parent=1 // pred_check_branch
      %27 = sbr.rel (0) target = $region13
    $region12: #{tpu_custom_call.1} parent=1 // pred_region
      _
    $region13: #{tpu_custom_call.1} parent=1 // pred_fallthru
      _
    // Predicated region
    $region14: #{tpu_custom_call.1} parent=1 // pred_check
      _
    $region15: #{tpu_custom_call.1} parent=1 // pred_check_branch
      %29 = sbr.rel (0) target = $region17
    $region16: #{tpu_custom_call.1} parent=1 // pred_region
      _
    $region17: #{tpu_custom_call.1} parent=1 // pred_fallthru
      _
    // Predicated region
    $region18: #{tpu_custom_call.1} parent=1 // pred_check
      _
    $region19: #{tpu_custom_call.1} parent=1 // pred_check_branch
      %31 = sbr.rel (0) target = $region21
    $region20: #{tpu_custom_call.1} parent=1 // pred_region
      _
    $region21: #{tpu_custom_call.1} parent=1 // pred_fallthru
      _
    // Predicated region
    $region22: #{tpu_custom_call.1} parent=1 // pred_check
      _
    $region23: #{tpu_custom_call.1} parent=1 // pred_check_branch
      %33 = sbr.rel (0) target = $region25
    $region24: #{tpu_custom_call.1} parent=1 // pred_region
      _
    $region25: #{tpu_custom_call.1} parent=1 // pred_fallthru
      _
    // Predicated region
    $region26: #{tpu_custom_call.1} parent=1 // pred_check
      _
    $region27: #{tpu_custom_call.1} parent=1 // pred_check_branch
      %35 = sbr.rel (0) target = $region29
    $region28: #{tpu_custom_call.1} parent=1 // pred_region
      _
    $region29: #{tpu_custom_call.1} parent=1 // pred_fallthru
      _
    // Predicated region
    $region30: #{tpu_custom_call.1} parent=1 // pred_check
      _
    $region31: #{tpu_custom_call.1} parent=1 // pred_check_branch
      %37 = sbr.rel (0) target = $region33
    $region32: #{tpu_custom_call.1} parent=1 // pred_region
      _
    $region33: #{tpu_custom_call.1} parent=1 // pred_fallthru
      _
    // Predicated region
    $region34: #{tpu_custom_call.1} parent=1 // pred_check
      _
    $region35: #{tpu_custom_call.1} parent=1 // pred_check_branch
      %39 = sbr.rel (0) target = $region37
    $region36: #{tpu_custom_call.1} parent=1 // pred_region
      _
    $region37: #{tpu_custom_call.1} parent=1 // pred_fallthru
      _
    // Predicated region
    $region38: #{tpu_custom_call.1} parent=1 // pred_check
      _
    $region39: #{tpu_custom_call.1} parent=1 // pred_check_branch
      %41 = sbr.rel (0) target = $region41
    $region40: #{tpu_custom_call.1} parent=1 // pred_region
      _
    $region41: #{tpu_custom_call.1} parent=1 // pred_fallthru
      _
    // Predicated region
    $region42: #{tpu_custom_call.1} parent=1 // pred_check
      _
    $region43: #{tpu_custom_call.1} parent=1 // pred_check_branch
      %43 = sbr.rel (0) target = $region45
    $region44: #{tpu_custom_call.1} parent=1 // pred_region
      _
    $region45: #{tpu_custom_call.1} parent=1 // pred_fallthru
      _
    // Predicated region
    $region46: #{tpu_custom_call.1} parent=1 // pred_check
      _
    $region47: #{tpu_custom_call.1} parent=1 // pred_check_branch
      %45 = sbr.rel (0) target = $region49
    $region48: #{tpu_custom_call.1} parent=1 // pred_region
      _
    $region49: #{tpu_custom_call.1} parent=1 // pred_fallthru
      _
    // Predicated region
    $region50: #{tpu_custom_call.1} parent=1 // pred_check
      _
    $region51: #{tpu_custom_call.1} parent=1 // pred_check_branch
      %47 = sbr.rel (0) target = $region53
    $region52: #{tpu_custom_call.1} parent=1 // pred_region
      _
    $region53: #{tpu_custom_call.1} parent=1 // pred_fallthru
      _
    // Predicated region
    $region54: #{tpu_custom_call.1} parent=1 // pred_check
      _
    $region55: #{tpu_custom_call.1} parent=1 // pred_check_branch
      %49 = sbr.rel (0) target = $region57
    $region56: #{tpu_custom_call.1} parent=1 // pred_region
      _
    $region57: #{tpu_custom_call.1} parent=1 // pred_fallthru
      _
    // Predicated region
    $region58: #{tpu_custom_call.1} parent=1 // pred_check
      _
    $region59: #{tpu_custom_call.1} parent=1 // pred_check_branch
      %51 = sbr.rel (0) target = $region61
    $region60: #{tpu_custom_call.1} parent=1 // pred_region
      _
    $region61: #{tpu_custom_call.1} parent=1 // pred_fallthru
      _
    %v52 = vld [vmem:[%s3] sm:$0xff]
    %v53 = vld [vmem:[%s3 + $0x8] sm:$0xff]
    %v54 = vld [vmem:[%s3 + $0x10] sm:$0xff]
    %v55 = vld [vmem:[%s3 + $0x18] sm:$0xff]
    %v56 = vld [vmem:[%s4] sm:$0xff]
    %v57 = vld [vmem:[%s4 + $0x8] sm:$0xff]
    %v58 = vld [vmem:[%s4 + $0x10] sm:$0xff]
    %v59 = vld [vmem:[%s4 + $0x18] sm:$0xff]
    %v60 = vld [vmem:[%s5] sm:$0xff]
    %v61 = vld [vmem:[%s5 + $0x8] sm:$0xff]
    %v62 = vld [vmem:[%s5 + $0x10] sm:$0xff]
    %v63 = vld [vmem:[%s5 + $0x18] sm:$0xff]
    %v64 = vld [vmem:[%s5 + $0x20] sm:$0xff]
    %v65 = vld [vmem:[%s5 + $0x28] sm:$0xff]
    %v66 = vld [vmem:[%s5 + $0x30] sm:$0xff]
    %v67 = vld [vmem:[%s5 + $0x38] sm:$0xff]
    %v68 = vld [vmem:[%s5 + $0x40] sm:$0xff]
    %v69 = vld [vmem:[%s5 + $0x48] sm:$0xff]
    %v70 = vld [vmem:[%s5 + $0x50] sm:$0xff]
    %v71 = vld [vmem:[%s5 + $0x58] sm:$0xff]
    %v72 = vld [vmem:[%s5 + $0x60] sm:$0xff]
    %v73 = vld [vmem:[%s5 + $0x68] sm:$0xff]
    %v74 = vld [vmem:[%s5 + $0x70] sm:$0xff]
    %v75 = vld [vmem:[%s5 + $0x78] sm:$0xff]
    %v76 = vld [vmem:[%s6] sm:$0xff]
    %v77 = vld [vmem:[%s6 + $0x8] sm:$0xff]
    %v78 = vld [vmem:[%s6 + $0x10] sm:$0xff]
    %v79 = vld [vmem:[%s6 + $0x18] sm:$0xff]
    %v80 = vld [vmem:[%s6 + $0x20] sm:$0xff]
    %v81 = vld [vmem:[%s6 + $0x28] sm:$0xff]
    %v82 = vld [vmem:[%s6 + $0x30] sm:$0xff]
    %v83 = vld [vmem:[%s6 + $0x38] sm:$0xff]
    %v84 = vld [vmem:[%s6 + $0x40] sm:$0xff]
    %v85 = vld [vmem:[%s6 + $0x48] sm:$0xff]
    %v86 = vld [vmem:[%s6 + $0x50] sm:$0xff]
    %v87 = vld [vmem:[%s6 + $0x58] sm:$0xff]
    %v88 = vld [vmem:[%s6 + $0x60] sm:$0xff]
    %v89 = vld [vmem:[%s6 + $0x68] sm:$0xff]
    %v90 = vld [vmem:[%s6 + $0x70] sm:$0xff]
    %v91 = vld [vmem:[%s6 + $0x78] sm:$0xff]
    %v92 = vld [vmem:[%s7] sm:$0xff]
    %v93 = vld [vmem:[%s7 + $0x8] sm:$0xff]
    %v94 = vld [vmem:[%s7 + $0x10] sm:$0xff]
    %v95 = vld [vmem:[%s7 + $0x18] sm:$0xff]
    %v96 = vld [vmem:[%s7 + $0x20] sm:$0xff]
    %v97 = vld [vmem:[%s7 + $0x28] sm:$0xff]
    %v98 = vld [vmem:[%s7 + $0x30] sm:$0xff]
    %v99 = vld [vmem:[%s7 + $0x38] sm:$0xff]
    %v100 = vld [vmem:[%s7 + $0x40] sm:$0xff]
    %v101 = vld [vmem:[%s7 + $0x48] sm:$0xff]
    %v102 = vld [vmem:[%s7 + $0x50] sm:$0xff]
    %v103 = vld [vmem:[%s7 + $0x58] sm:$0xff]
    %v104 = vld [vmem:[%s7 + $0x60] sm:$0xff]
    %v105 = vld [vmem:[%s7 + $0x68] sm:$0xff]
    %v106 = vld [vmem:[%s7 + $0x70] sm:$0xff]
    %v107 = vld [vmem:[%s7 + $0x78] sm:$0xff]
    %v108 = vld [vmem:[%s2] sm:$0xff]
    %v109 = vld [vmem:[%s2 + $0x8] sm:$0xff]
    %v110 = vld [vmem:[%s2 + $0x10] sm:$0xff]
    %v111 = vld [vmem:[%s2 + $0x18] sm:$0xff]
    %v112 = vld [vmem:[%s0] sm:$0xff]
    %v113 = vld [vmem:[%s0 + $0x8] sm:$0xff]
    %v114 = vld [vmem:[%s0 + $0x10] sm:$0xff]
    %v115 = vld [vmem:[%s0 + $0x18] sm:$0xff]
    %v116 = vld [vmem:[%s1] sm:$0xff]
    %v117 = vld [vmem:[%s1 + $0x8] sm:$0xff]
    %vm118 = vcmask 130048
    %v120 = vsel %vm118, %v112, 0
    %v123 = vsel %vm118, %v113, 0
    %v126 = vsel %vm118, %v114, 0
    %v129 = vsel %vm118, %v115, 0
    %131 = vmatprep.subr.mxu0 0.0
    %132 = vmatpush1.msra.mxu0 0.0
    %133 = vmatprep.subr.mxu0 0.0
    %134 = vmatpush1.msra.mxu0 0.0
    %135 = vmatprep.subr.mxu0 0.0
    %136 = vmatpush1.msra.mxu0 0.0
    %137 = vmatprep.subr.mxu0 0.0
    %138 = vmatpush1.msra.mxu0 0.0
    %139 = vmatprep.subr.mxu0 0.0
    %140 = vmatpush1.msra.mxu0 0.0
    %141 = vmatprep.subr.mxu0 0.0
    %142 = vmatpush1.msra.mxu0 0.0
    %143 = vmatprep.subr.mxu0 0.0
    %144 = vmatpush1.msra.mxu0 0.0
    %145 = vmatprep.subr.mxu0 0.0
    %146 = vmatpush1.msra.mxu0 0.0
    %147 = vmatprep.subr.mxu0 0.0
    %148 = vmatpush1.msra.mxu0 0.0
    %149 = vmatprep.subr.mxu0 0.0
    %150 = vmatpush1.msra.mxu0 0.0
    %151 = vmatprep.subr.mxu0 0.0
    %152 = vmatpush1.msra.mxu0 0.0
    %153 = vmatprep.subr.mxu0 0.0
    %154 = vmatpush1.msra.mxu0 0.0
    %155 = vmatprep.subr.mxu0 0.0
    %156 = vmatpush1.msra.mxu0 0.0
    %157 = vmatprep.subr.mxu0 0.0
    %158 = vmatpush1.msra.mxu0 0.0
    %159 = vmatprep.subr.mxu0 0.0
    %160 = vmatpush1.msra.mxu0 %v117
    %161 = vmatprep.subr.mxu0 0.0
    %162 = vmatpush1.msra.mxu0 %v116
    %163 = vmatprep.subr.mxu0 0.0
    %164 = vmatpush2.msra.mxu0 0.0
    %165 = vmatprep.subr.mxu0 0.0
    %166 = vmatpush2.msra.mxu0 0.0
    %167 = vmatprep.subr.mxu0 0.0
    %168 = vmatpush2.msra.mxu0 0.0
    %169 = vmatprep.subr.mxu0 0.0
    %170 = vmatpush2.msra.mxu0 0.0
    %171 = vmatprep.subr.mxu0 0.0
    %172 = vmatpush2.msra.mxu0 0.0
    %173 = vmatprep.subr.mxu0 0.0
    %174 = vmatpush2.msra.mxu0 0.0
    %175 = vmatprep.subr.mxu0 0.0
    %176 = vmatpush2.msra.mxu0 0.0
    %177 = vmatprep.subr.mxu0 0.0
    %178 = vmatpush2.msra.mxu0 0.0
    %179 = vmatprep.subr.mxu0 0.0
    %180 = vmatpush2.msra.mxu0 0.0
    %181 = vmatprep.subr.mxu0 0.0
    %182 = vmatpush2.msra.mxu0 0.0
    %183 = vmatprep.subr.mxu0 0.0
    %184 = vmatpush2.msra.mxu0 0.0
    %185 = vmatprep.subr.mxu0 0.0
    %186 = vmatpush2.msra.mxu0 0.0
    %187 = vmatprep.subr.mxu0 0.0
    %188 = vmatpush2.msra.mxu0 0.0
    %189 = vmatprep.subr.mxu0 0.0
    %190 = vmatpush2.msra.mxu0 0.0
    %191 = vmatprep.subr.mxu0 0.0
    %192 = vmatpush2.msra.mxu0 0.0
    %193 = vmatprep.subr.mxu0 0.0
    %194 = vmatpush2.msra.mxu0 0.0
    %195 = vmatprep.mubr.f32.mxu0 0.0
    %196 = vmatmul.mubr.f32.gmra.mxu0 %v120
    %v197 = vpop.f32.mrf.mxu0
    %v198 = vadd.f32 0.0, %v197
    %v199 = vpop.f32.mrf.mxu0
    %200 = vmatprep.mubr.f32.mxu0 0.0
    %201 = vmatmul.mubr.f32.gmra.mxu0 %v123
    %v202 = vpop.f32.mrf.mxu0
    %v203 = vadd.f32 0.0, %v202
    %v204 = vpop.f32.mrf.mxu0
    %205 = vmatprep.mubr.f32.mxu0 0.0
    %206 = vmatmul.mubr.f32.gmra.mxu0 %v126
    %v207 = vpop.f32.mrf.mxu0
    %v208 = vadd.f32 0.0, %v207
    %v209 = vpop.f32.mrf.mxu0
    %210 = vmatprep.mubr.f32.mxu0 0.0
    %211 = vmatmul.mubr.f32.gmra.mxu0 %v129
    %v212 = vpop.f32.mrf.mxu0
    %v213 = vadd.f32 0.0, %v212
    %v214 = vpop.f32.mrf.mxu0
    %215 = vdwg.mxu0
    %v216 = vld [vmem:[%s8] sm:$0xff]
    %v217 = vld [vmem:[%s8 + $0x8] sm:$0xff]
    %v218 = vld [vmem:[%s8 + $0x10] sm:$0xff]
    %v219 = vld [vmem:[%s8 + $0x18] sm:$0xff]
    %vm220 = vcmask 261120
    %v222 = vsel %vm220, %v198, 0
    %v225 = vsel %vm220, %v203, 0
    %v228 = vsel %vm220, %v208, 0
    %v231 = vsel %vm220, %v213, 0
    %233 = vmatprep.subr.mxu0 0.0
    %234 = vmatpush1.msra.mxu0 0.0
    %235 = vmatprep.subr.mxu0 0.0
    %236 = vmatpush1.msra.mxu0 0.0
    %237 = vmatprep.subr.mxu0 0.0
    %238 = vmatpush1.msra.mxu0 0.0
    %239 = vmatprep.subr.mxu0 0.0
    %240 = vmatpush1.msra.mxu0 0.0
    %241 = vmatprep.subr.mxu0 0.0
    %242 = vmatpush1.msra.mxu0 0.0
    %243 = vmatprep.subr.mxu0 0.0
    %244 = vmatpush1.msra.mxu0 0.0
    %245 = vmatprep.subr.mxu0 0.0
    %246 = vmatpush1.msra.mxu0 0.0
    %247 = vmatprep.subr.mxu0 0.0
    %248 = vmatpush1.msra.mxu0 0.0
    %249 = vmatprep.subr.mxu0 0.0
    %250 = vmatpush1.msra.mxu0 0.0
    %251 = vmatprep.subr.mxu0 0.0
    %252 = vmatpush1.msra.mxu0 0.0
    %253 = vmatprep.subr.mxu0 0.0
    %254 = vmatpush1.msra.mxu0 0.0
    %255 = vmatprep.subr.mxu0 0.0
    %256 = vmatpush1.msra.mxu0 0.0
    %257 = vmatprep.subr.mxu0 0.0
    %258 = vmatpush1.msra.mxu0 %v219
    %259 = vmatprep.subr.mxu0 0.0
    %260 = vmatpush1.msra.mxu0 %v218
    %261 = vmatprep.subr.mxu0 0.0
    %262 = vmatpush1.msra.mxu0 %v217
    %263 = vmatprep.subr.mxu0 0.0
    %264 = vmatpush1.msra.mxu0 %v216
    %265 = vmatprep.subr.mxu0 0.0
    %266 = vmatpush2.msra.mxu0 0.0
    %267 = vmatprep.subr.mxu0 0.0
    %268 = vmatpush2.msra.mxu0 0.0
    %269 = vmatprep.subr.mxu0 0.0
    %270 = vmatpush2.msra.mxu0 0.0
    %271 = vmatprep.subr.mxu0 0.0
    %272 = vmatpush2.msra.mxu0 0.0
    %273 = vmatprep.subr.mxu0 0.0
    %274 = vmatpush2.msra.mxu0 0.0
    %275 = vmatprep.subr.mxu0 0.0
    %276 = vmatpush2.msra.mxu0 0.0
    %277 = vmatprep.subr.mxu0 0.0
    %278 = vmatpush2.msra.mxu0 0.0
    %279 = vmatprep.subr.mxu0 0.0
    %280 = vmatpush2.msra.mxu0 0.0
    %281 = vmatprep.subr.mxu0 0.0
    %282 = vmatpush2.msra.mxu0 0.0
    %283 = vmatprep.subr.mxu0 0.0
    %284 = vmatpush2.msra.mxu0 0.0
    %285 = vmatprep.subr.mxu0 0.0
    %286 = vmatpush2.msra.mxu0 0.0
    %287 = vmatprep.subr.mxu0 0.0
    %288 = vmatpush2.msra.mxu0 0.0
    %289 = vmatprep.subr.mxu0 0.0
    %290 = vmatpush2.msra.mxu0 0.0
    %291 = vmatprep.subr.mxu0 0.0
    %292 = vmatpush2.msra.mxu0 0.0
    %293 = vmatprep.subr.mxu0 0.0
    %294 = vmatpush2.msra.mxu0 0.0
    %295 = vmatprep.subr.mxu0 0.0
    %296 = vmatpush2.msra.mxu0 0.0
    %297 = vmatprep.mubr.f32.mxu0 0.0
    %298 = vmatmul.mubr.f32.gmra.mxu0 %v222
    %v299 = vpop.f32.mrf.mxu0
    %v300 = vadd.f32 0.0, %v299
    %v301 = vpop.f32.mrf.mxu0
    %302 = vmatprep.mubr.f32.mxu0 0.0
    %303 = vmatmul.mubr.f32.gmra.mxu0 %v225
    %v304 = vpop.f32.mrf.mxu0
    %v305 = vadd.f32 0.0, %v304
    %v306 = vpop.f32.mrf.mxu0
    %307 = vmatprep.mubr.f32.mxu0 0.0
    %308 = vmatmul.mubr.f32.gmra.mxu0 %v228
    %v309 = vpop.f32.mrf.mxu0
    %v310 = vadd.f32 0.0, %v309
    %v311 = vpop.f32.mrf.mxu0
    %312 = vmatprep.mubr.f32.mxu0 0.0
    %313 = vmatmul.mubr.f32.gmra.mxu0 %v231
    %v314 = vpop.f32.mrf.mxu0
    %v315 = vadd.f32 0.0, %v314
    %v316 = vpop.f32.mrf.mxu0
    %317 = vdwg.mxu0
    %v318 = vld [vmem:[%s10] sm:$0xff]
    %v319 = vld [vmem:[%s10 + $0x8] sm:$0xff]
    %v320 = vld [vmem:[%s10 + $0x10] sm:$0xff]
    %v321 = vld [vmem:[%s10 + $0x18] sm:$0xff]
    %v323 = vsel %vm220, %v300, 0
    %v326 = vsel %vm220, %v305, 0
    %v329 = vsel %vm220, %v310, 0
    %v332 = vsel %vm220, %v315, 0
    %334 = vmatprep.subr.mxu0 0.0
    %335 = vmatpush1.msra.mxu0 0.0
    %336 = vmatprep.subr.mxu0 0.0
    %337 = vmatpush1.msra.mxu0 0.0
    %338 = vmatprep.subr.mxu0 0.0
    %339 = vmatpush1.msra.mxu0 0.0
    %340 = vmatprep.subr.mxu0 0.0
    %341 = vmatpush1.msra.mxu0 0.0
    %342 = vmatprep.subr.mxu0 0.0
    %343 = vmatpush1.msra.mxu0 0.0
    %344 = vmatprep.subr.mxu0 0.0
    %345 = vmatpush1.msra.mxu0 0.0
    %346 = vmatprep.subr.mxu0 0.0
    %347 = vmatpush1.msra.mxu0 0.0
    %348 = vmatprep.subr.mxu0 0.0
    %349 = vmatpush1.msra.mxu0 0.0
    %350 = vmatprep.subr.mxu0 0.0
    %351 = vmatpush1.msra.mxu0 0.0
    %352 = vmatprep.subr.mxu0 0.0
    %353 = vmatpush1.msra.mxu0 0.0
    %354 = vmatprep.subr.mxu0 0.0
    %355 = vmatpush1.msra.mxu0 0.0
    %356 = vmatprep.subr.mxu0 0.0
    %357 = vmatpush1.msra.mxu0 0.0
    %358 = vmatprep.subr.mxu0 0.0
    %359 = vmatpush1.msra.mxu0 %v321
    %360 = vmatprep.subr.mxu0 0.0
    %361 = vmatpush1.msra.mxu0 %v320
    %362 = vmatprep.subr.mxu0 0.0
    %363 = vmatpush1.msra.mxu0 %v319
    %364 = vmatprep.subr.mxu0 0.0
    %365 = vmatpush1.msra.mxu0 %v318
    %366 = vmatprep.subr.mxu0 0.0
    %367 = vmatpush2.msra.mxu0 0.0
    %368 = vmatprep.subr.mxu0 0.0
    %369 = vmatpush2.msra.mxu0 0.0
    %370 = vmatprep.subr.mxu0 0.0
    %371 = vmatpush2.msra.mxu0 0.0
    %372 = vmatprep.subr.mxu0 0.0
    %373 = vmatpush2.msra.mxu0 0.0
    %374 = vmatprep.subr.mxu0 0.0
    %375 = vmatpush2.msra.mxu0 0.0
    %376 = vmatprep.subr.mxu0 0.0
    %377 = vmatpush2.msra.mxu0 0.0
    %378 = vmatprep.subr.mxu0 0.0
    %379 = vmatpush2.msra.mxu0 0.0
    %380 = vmatprep.subr.mxu0 0.0
    %381 = vmatpush2.msra.mxu0 0.0
    %382 = vmatprep.subr.mxu0 0.0
    %383 = vmatpush2.msra.mxu0 0.0
    %384 = vmatprep.subr.mxu0 0.0
    %385 = vmatpush2.msra.mxu0 0.0
    %386 = vmatprep.subr.mxu0 0.0
    %387 = vmatpush2.msra.mxu0 0.0
    %388 = vmatprep.subr.mxu0 0.0
    %389 = vmatpush2.msra.mxu0 0.0
    %390 = vmatprep.subr.mxu0 0.0
    %391 = vmatpush2.msra.mxu0 0.0
    %392 = vmatprep.subr.mxu0 0.0
    %393 = vmatpush2.msra.mxu0 0.0
    %394 = vmatprep.subr.mxu0 0.0
    %395 = vmatpush2.msra.mxu0 0.0
    %396 = vmatprep.subr.mxu0 0.0
    %397 = vmatpush2.msra.mxu0 0.0
    %398 = vmatprep.mubr.f32.mxu0 0.0
    %399 = vmatmul.mubr.f32.gmra.mxu0 %v323
    %v400 = vpop.f32.mrf.mxu0
    %v401 = vadd.f32 0.0, %v400
    %v402 = vpop.f32.mrf.mxu0
    %403 = vmatprep.mubr.f32.mxu0 0.0
    %404 = vmatmul.mubr.f32.gmra.mxu0 %v326
    %v405 = vpop.f32.mrf.mxu0
    %v406 = vadd.f32 0.0, %v405
    %v407 = vpop.f32.mrf.mxu0
    %408 = vmatprep.mubr.f32.mxu0 0.0
    %409 = vmatmul.mubr.f32.gmra.mxu0 %v329
    %v410 = vpop.f32.mrf.mxu0
    %v411 = vadd.f32 0.0, %v410
    %v412 = vpop.f32.mrf.mxu0
    %413 = vmatprep.mubr.f32.mxu0 0.0
    %414 = vmatmul.mubr.f32.gmra.mxu0 %v332
    %v415 = vpop.f32.mrf.mxu0
    %v416 = vadd.f32 0.0, %v415
    %v417 = vpop.f32.mrf.mxu0
    %418 = vdwg.mxu0
    %v419 = vld [vmem:[%s9] sm:$0xff]
    %v420 = vld [vmem:[%s9 + $0x8] sm:$0xff]
    %v421 = vld [vmem:[%s9 + $0x10] sm:$0xff]
    %v422 = vld [vmem:[%s9 + $0x18] sm:$0xff]
    %423 = vmatprep.subr.mxu0 0.0
    %424 = vmatpush1.msra.mxu0 0.0
    %425 = vmatprep.subr.mxu0 0.0
    %426 = vmatpush1.msra.mxu0 0.0
    %427 = vmatprep.subr.mxu0 0.0
    %428 = vmatpush1.msra.mxu0 0.0
    %429 = vmatprep.subr.mxu0 0.0
    %430 = vmatpush1.msra.mxu0 0.0
    %431 = vmatprep.subr.mxu0 0.0
    %432 = vmatpush1.msra.mxu0 0.0
    %433 = vmatprep.subr.mxu0 0.0
    %434 = vmatpush1.msra.mxu0 0.0
    %435 = vmatprep.subr.mxu0 0.0
    %436 = vmatpush1.msra.mxu0 0.0
    %437 = vmatprep.subr.mxu0 0.0
    %438 = vmatpush1.msra.mxu0 0.0
    %439 = vmatprep.subr.mxu0 0.0
    %440 = vmatpush1.msra.mxu0 0.0
    %441 = vmatprep.subr.mxu0 0.0
    %442 = vmatpush1.msra.mxu0 0.0
    %443 = vmatprep.subr.mxu0 0.0
    %444 = vmatpush1.msra.mxu0 0.0
    %445 = vmatprep.subr.mxu0 0.0
    %446 = vmatpush1.msra.mxu0 0.0
    %447 = vmatprep.subr.mxu0 0.0
    %448 = vmatpush1.msra.mxu0 %v422
    %449 = vmatprep.subr.mxu0 0.0
    %450 = vmatpush1.msra.mxu0 %v421
    %451 = vmatprep.subr.mxu0 0.0
    %452 = vmatpush1.msra.mxu0 %v420
    %453 = vmatprep.subr.mxu0 0.0
    %454 = vmatpush1.msra.mxu0 %v419
    %455 = vmatprep.subr.mxu0 0.0
    %456 = vmatpush2.msra.mxu0 0.0
    %457 = vmatprep.subr.mxu0 0.0
    %458 = vmatpush2.msra.mxu0 0.0
    %459 = vmatprep.subr.mxu0 0.0
    %460 = vmatpush2.msra.mxu0 0.0
    %461 = vmatprep.subr.mxu0 0.0
    %462 = vmatpush2.msra.mxu0 0.0
    %463 = vmatprep.subr.mxu0 0.0
    %464 = vmatpush2.msra.mxu0 0.0
    %465 = vmatprep.subr.mxu0 0.0
    %466 = vmatpush2.msra.mxu0 0.0
    %467 = vmatprep.subr.mxu0 0.0
    %468 = vmatpush2.msra.mxu0 0.0
    %469 = vmatprep.subr.mxu0 0.0
    %470 = vmatpush2.msra.mxu0 0.0
    %471 = vmatprep.subr.mxu0 0.0
    %472 = vmatpush2.msra.mxu0 0.0
    %473 = vmatprep.subr.mxu0 0.0
    %474 = vmatpush2.msra.mxu0 0.0
    %475 = vmatprep.subr.mxu0 0.0
    %476 = vmatpush2.msra.mxu0 0.0
    %477 = vmatprep.subr.mxu0 0.0
    %478 = vmatpush2.msra.mxu0 0.0
    %479 = vmatprep.subr.mxu0 0.0
    %480 = vmatpush2.msra.mxu0 0.0
    %481 = vmatprep.subr.mxu0 0.0
    %482 = vmatpush2.msra.mxu0 0.0
    %483 = vmatprep.subr.mxu0 0.0
    %484 = vmatpush2.msra.mxu0 0.0
    %485 = vmatprep.subr.mxu0 0.0
    %486 = vmatpush2.msra.mxu0 0.0
    %487 = vmatprep.mubr.f32.mxu0 0.0
    %488 = vmatmul.mubr.f32.gmra.mxu0 %v323
    %v489 = vpop.f32.mrf.mxu0
    %v490 = vadd.f32 0.0, %v489
    %v491 = vpop.f32.mrf.mxu0
    %492 = vmatprep.mubr.f32.mxu0 0.0
    %493 = vmatmul.mubr.f32.gmra.mxu0 %v326
    %v494 = vpop.f32.mrf.mxu0
    %v495 = vadd.f32 0.0, %v494
    %v496 = vpop.f32.mrf.mxu0
    %497 = vmatprep.mubr.f32.mxu0 0.0
    %498 = vmatmul.mubr.f32.gmra.mxu0 %v329
    %v499 = vpop.f32.mrf.mxu0
    %v500 = vadd.f32 0.0, %v499
    %v501 = vpop.f32.mrf.mxu0
    %502 = vmatprep.mubr.f32.mxu0 0.0
    %503 = vmatmul.mubr.f32.gmra.mxu0 %v332
    %v504 = vpop.f32.mrf.mxu0
    %v505 = vadd.f32 0.0, %v504
    %v506 = vpop.f32.mrf.mxu0
    %507 = vdwg.mxu0
    %v508 = vmul.f32 %v490, %v56
    %v509 = vmul.f32 %v495, %v57
    %v510 = vmul.f32 %v500, %v58
    %v511 = vmul.f32 %v505, %v59
    %v512 = vadd.f32 %v508, %v509
    %v513 = vadd.f32 %v512, %v510
    %v514 = vadd.f32 %v513, %v511
    %v515 = vrot.slane %v514, 4
    %v516 = vadd.f32 %v514, %v515
    %v517 = vrot.slane %v516, 2
    %v518 = vadd.f32 %v516, %v517
    %v519 = vrot.slane %v518, 1
    %v520 = vadd.f32 %v518, %v519
    %v521 = vmax.f32 %v490, %v495
    %v522 = vmax.f32 %v500, %v505
    %v523 = vmax.f32 %v521, %v522
    %v524 = vrot.slane %v523, 4
    %v525 = vmax.f32 %v523, %v524
    %v526 = vrot.slane %v525, 2
    %v527 = vmax.f32 %v525, %v526
    %v528 = vrot.slane %v527, 1
    %v529 = vmax.f32 %v527, %v528
    %v530 = vadd.f32 %v401, %v520
    %v531 = vadd.f32 %v406, %v520
    %v532 = vadd.f32 %v411, %v520
    %v533 = vadd.f32 %v416, %v520
    %vm534 = vcmp.gt.f32.partialorder %v530, 0.0
    %vm535 = vcmp.gt.f32.partialorder %v531, 0.0
    %vm536 = vcmp.gt.f32.partialorder %v532, 0.0
    %vm537 = vcmp.gt.f32.partialorder %v533, 0.0
    %v538 = vmul.f32 %v530, 0.2
    %v539 = vmul.f32 %v531, 0.2
    %v540 = vmul.f32 %v532, 0.2
    %v541 = vmul.f32 %v533, 0.2
    %v542 = vsel %vm534, %v530, %v538
    %v543 = vsel %vm535, %v531, %v539
    %v544 = vsel %vm536, %v532, %v540
    %v545 = vsel %vm537, %v533, %v541
    %v546 = vadd.f32 %v401, %v529
    %v547 = vadd.f32 %v406, %v529
    %v548 = vadd.f32 %v411, %v529
    %v549 = vadd.f32 %v416, %v529
    %vm550 = vcmp.gt.f32.partialorder %v546, 0.0
    %vm551 = vcmp.gt.f32.partialorder %v547, 0.0
    %vm552 = vcmp.gt.f32.partialorder %v548, 0.0
    %vm553 = vcmp.gt.f32.partialorder %v549, 0.0
    %v554 = vmul.f32 %v546, 0.2
    %v555 = vmul.f32 %v547, 0.2
    %v556 = vmul.f32 %v548, 0.2
    %v557 = vmul.f32 %v549, 0.2
    %v558 = vsel %vm550, %v546, %v554
    %v559 = vsel %vm551, %v547, %v555
    %v560 = vsel %vm552, %v548, %v556
    %v561 = vsel %vm553, %v549, %v557
    %v562 = vadd.f32 %v542, %v52
    %v563 = vadd.f32 %v543, %v53
    %v564 = vadd.f32 %v544, %v54
    %v565 = vadd.f32 %v545, %v55
    %v566 = vsub.f32 %v562, %v558
    %v567 = vsub.f32 %v563, %v559
    %v568 = vsub.f32 %v564, %v560
    %v569 = vsub.f32 %v565, %v561
    %v570 = vmul.f32 %v566, 1.442695
    %v571 = vpow.pop %v570
    %v572 = vmul.f32 %v567, 1.442695
    %v573 = vpow.pop %v572
    %v574 = vmul.f32 %v568, 1.442695
    %v575 = vpow.pop %v574
    %v576 = vmul.f32 %v569, 1.442695
    %v577 = vpow.pop %v576
    %578 = vmatprep.subr.mxu0 0.0
    %579 = vmatpush1.msra.mxu0 %v107
    %580 = vmatprep.subr.mxu0 0.0
    %581 = vmatpush1.msra.mxu0 %v106
    %582 = vmatprep.subr.mxu0 0.0
    %583 = vmatpush1.msra.mxu0 %v105
    %584 = vmatprep.subr.mxu0 0.0
    %585 = vmatpush1.msra.mxu0 %v104
    %586 = vmatprep.subr.mxu0 0.0
    %587 = vmatpush1.msra.mxu0 %v103
    %588 = vmatprep.subr.mxu0 0.0
    %589 = vmatpush1.msra.mxu0 %v102
    %590 = vmatprep.subr.mxu0 0.0
    %591 = vmatpush1.msra.mxu0 %v101
    %592 = vmatprep.subr.mxu0 0.0
    %593 = vmatpush1.msra.mxu0 %v100
    %594 = vmatprep.subr.mxu0 0.0
    %595 = vmatpush1.msra.mxu0 %v99
    %596 = vmatprep.subr.mxu0 0.0
    %597 = vmatpush1.msra.mxu0 %v98
    %598 = vmatprep.subr.mxu0 0.0
    %599 = vmatpush1.msra.mxu0 %v97
    %600 = vmatprep.subr.mxu0 0.0
    %601 = vmatpush1.msra.mxu0 %v96
    %602 = vmatprep.subr.mxu0 0.0
    %603 = vmatpush1.msra.mxu0 %v95
    %604 = vmatprep.subr.mxu0 0.0
    %605 = vmatpush1.msra.mxu0 %v94
    %606 = vmatprep.subr.mxu0 0.0
    %607 = vmatpush1.msra.mxu0 %v93
    %608 = vmatprep.subr.mxu0 0.0
    %609 = vmatpush1.msra.mxu0 %v92
    %610 = vmatprep.subr.mxu0 0.0
    %611 = vmatpush2.msra.mxu0 0.0
    %612 = vmatprep.subr.mxu0 0.0
    %613 = vmatpush2.msra.mxu0 0.0
    %614 = vmatprep.subr.mxu0 0.0
    %615 = vmatpush2.msra.mxu0 0.0
    %616 = vmatprep.subr.mxu0 0.0
    %617 = vmatpush2.msra.mxu0 0.0
    %618 = vmatprep.subr.mxu0 0.0
    %619 = vmatpush2.msra.mxu0 0.0
    %620 = vmatprep.subr.mxu0 0.0
    %621 = vmatpush2.msra.mxu0 0.0
    %622 = vmatprep.subr.mxu0 0.0
    %623 = vmatpush2.msra.mxu0 0.0
    %624 = vmatprep.subr.mxu0 0.0
    %625 = vmatpush2.msra.mxu0 0.0
    %626 = vmatprep.subr.mxu0 0.0
    %627 = vmatpush2.msra.mxu0 0.0
    %628 = vmatprep.subr.mxu0 0.0
    %629 = vmatpush2.msra.mxu0 0.0
    %630 = vmatprep.subr.mxu0 0.0
    %631 = vmatpush2.msra.mxu0 0.0
    %632 = vmatprep.subr.mxu0 0.0
    %633 = vmatpush2.msra.mxu0 0.0
    %634 = vmatprep.subr.mxu0 0.0
    %635 = vmatpush2.msra.mxu0 0.0
    %636 = vmatprep.subr.mxu0 0.0
    %637 = vmatpush2.msra.mxu0 0.0
    %638 = vmatprep.subr.mxu0 0.0
    %639 = vmatpush2.msra.mxu0 0.0
    %640 = vmatprep.subr.mxu0 0.0
    %641 = vmatpush2.msra.mxu0 0.0
    %642 = vmatprep.mubr.f32.mxu0 0.0
    %643 = vmatmul.mubr.f32.gmra.mxu0 %v571
    %v644 = vpop.f32.mrf.mxu0
    %v645 = vadd.f32 0.0, %v644
    %v646 = vpop.f32.mrf.mxu0
    %647 = vmatprep.mubr.f32.mxu0 0.0
    %648 = vmatmul.mubr.f32.gmra.mxu0 %v573
    %v649 = vpop.f32.mrf.mxu0
    %v650 = vadd.f32 0.0, %v649
    %v651 = vpop.f32.mrf.mxu0
    %652 = vmatprep.mubr.f32.mxu0 0.0
    %653 = vmatmul.mubr.f32.gmra.mxu0 %v575
    %v654 = vpop.f32.mrf.mxu0
    %v655 = vadd.f32 0.0, %v654
    %v656 = vpop.f32.mrf.mxu0
    %657 = vmatprep.mubr.f32.mxu0 0.0
    %658 = vmatmul.mubr.f32.gmra.mxu0 %v577
    %v659 = vpop.f32.mrf.mxu0
    %v660 = vadd.f32 0.0, %v659
    %v661 = vpop.f32.mrf.mxu0
    %662 = vdwg.mxu0
    %v663 = vrcp.pop %v645
    %v664 = vmul.f32 %v571, %v663
    %v665 = vrcp.pop %v650
    %v666 = vmul.f32 %v573, %v665
    %v667 = vrcp.pop %v655
    %v668 = vmul.f32 %v575, %v667
    %v669 = vrcp.pop %v660
    %v670 = vmul.f32 %v577, %v669
    %v672 = vsel %vm220, %v60, 0
    %v675 = vsel %vm220, %v61, 0
    %v678 = vsel %vm220, %v62, 0
    %v681 = vsel %vm220, %v63, 0
    %v684 = vsel %vm220, %v64, 0
    %v687 = vsel %vm220, %v65, 0
    %v690 = vsel %vm220, %v66, 0
    %v693 = vsel %vm220, %v67, 0
    %v696 = vsel %vm220, %v68, 0
    %v699 = vsel %vm220, %v69, 0
    %v702 = vsel %vm220, %v70, 0
    %v705 = vsel %vm220, %v71, 0
    %v708 = vsel %vm220, %v72, 0
    %v711 = vsel %vm220, %v73, 0
    %v714 = vsel %vm220, %v74, 0
    %v717 = vsel %vm220, %v75, 0
    %719 = vmatprep.subr.mxu0 0.0
    %720 = vmatpush1.msra.mxu0 0.0
    %721 = vmatprep.subr.mxu0 0.0
    %722 = vmatpush1.msra.mxu0 0.0
    %723 = vmatprep.subr.mxu0 0.0
    %724 = vmatpush1.msra.mxu0 0.0
    %725 = vmatprep.subr.mxu0 0.0
    %726 = vmatpush1.msra.mxu0 0.0
    %727 = vmatprep.subr.mxu0 0.0
    %728 = vmatpush1.msra.mxu0 0.0
    %729 = vmatprep.subr.mxu0 0.0
    %730 = vmatpush1.msra.mxu0 0.0
    %731 = vmatprep.subr.mxu0 0.0
    %732 = vmatpush1.msra.mxu0 0.0
    %733 = vmatprep.subr.mxu0 0.0
    %734 = vmatpush1.msra.mxu0 0.0
    %735 = vmatprep.subr.mxu0 0.0
    %736 = vmatpush1.msra.mxu0 0.0
    %737 = vmatprep.subr.mxu0 0.0
    %738 = vmatpush1.msra.mxu0 0.0
    %739 = vmatprep.subr.mxu0 0.0
    %740 = vmatpush1.msra.mxu0 0.0
    %741 = vmatprep.subr.mxu0 0.0
    %742 = vmatpush1.msra.mxu0 0.0
    %743 = vmatprep.subr.mxu0 0.0
    %744 = vmatpush1.msra.mxu0 %v315
    %745 = vmatprep.subr.mxu0 0.0
    %746 = vmatpush1.msra.mxu0 %v310
    %747 = vmatprep.subr.mxu0 0.0
    %748 = vmatpush1.msra.mxu0 %v305
    %749 = vmatprep.subr.mxu0 0.0
    %750 = vmatpush1.msra.mxu0 %v300
    %751 = vmatprep.subr.mxu0 0.0
    %752 = vmatpush2.msra.mxu0 0.0
    %753 = vmatprep.subr.mxu0 0.0
    %754 = vmatpush2.msra.mxu0 0.0
    %755 = vmatprep.subr.mxu0 0.0
    %756 = vmatpush2.msra.mxu0 0.0
    %757 = vmatprep.subr.mxu0 0.0
    %758 = vmatpush2.msra.mxu0 0.0
    %759 = vmatprep.subr.mxu0 0.0
    %760 = vmatpush2.msra.mxu0 0.0
    %761 = vmatprep.subr.mxu0 0.0
    %762 = vmatpush2.msra.mxu0 0.0
    %763 = vmatprep.subr.mxu0 0.0
    %764 = vmatpush2.msra.mxu0 0.0
    %765 = vmatprep.subr.mxu0 0.0
    %766 = vmatpush2.msra.mxu0 0.0
    %767 = vmatprep.subr.mxu0 0.0
    %768 = vmatpush2.msra.mxu0 0.0
    %769 = vmatprep.subr.mxu0 0.0
    %770 = vmatpush2.msra.mxu0 0.0
    %771 = vmatprep.subr.mxu0 0.0
    %772 = vmatpush2.msra.mxu0 0.0
    %773 = vmatprep.subr.mxu0 0.0
    %774 = vmatpush2.msra.mxu0 0.0
    %775 = vmatprep.subr.mxu0 0.0
    %776 = vmatpush2.msra.mxu0 0.0
    %777 = vmatprep.subr.mxu0 0.0
    %778 = vmatpush2.msra.mxu0 0.0
    %779 = vmatprep.subr.mxu0 0.0
    %780 = vmatpush2.msra.mxu0 0.0
    %781 = vmatprep.subr.mxu0 0.0
    %782 = vmatpush2.msra.mxu0 0.0
    %783 = vmatprep.mubr.f32.mxu0 0.0
    %784 = vmatmul.mubr.f32.gmra.mxu0 %v672
    %v785 = vpop.f32.mrf.mxu0
    %v786 = vadd.f32 0.0, %v785
    %v787 = vpop.f32.mrf.mxu0
    %788 = vmatprep.mubr.f32.mxu0 0.0
    %789 = vmatmul.mubr.f32.gmra.mxu0 %v675
    %v790 = vpop.f32.mrf.mxu0
    %v791 = vadd.f32 0.0, %v790
    %v792 = vpop.f32.mrf.mxu0
    %793 = vmatprep.mubr.f32.mxu0 0.0
    %794 = vmatmul.mubr.f32.gmra.mxu0 %v678
    %v795 = vpop.f32.mrf.mxu0
    %v796 = vadd.f32 0.0, %v795
    %v797 = vpop.f32.mrf.mxu0
    %798 = vmatprep.mubr.f32.mxu0 0.0
    %799 = vmatmul.mubr.f32.gmra.mxu0 %v681
    %v800 = vpop.f32.mrf.mxu0
    %v801 = vadd.f32 0.0, %v800
    %v802 = vpop.f32.mrf.mxu0
    %803 = vmatprep.mubr.f32.mxu0 0.0
    %804 = vmatmul.mubr.f32.gmra.mxu0 %v684
    %v805 = vpop.f32.mrf.mxu0
    %v806 = vadd.f32 0.0, %v805
    %v807 = vpop.f32.mrf.mxu0
    %808 = vmatprep.mubr.f32.mxu0 0.0
    %809 = vmatmul.mubr.f32.gmra.mxu0 %v687
    %v810 = vpop.f32.mrf.mxu0
    %v811 = vadd.f32 0.0, %v810
    %v812 = vpop.f32.mrf.mxu0
    %813 = vmatprep.mubr.f32.mxu0 0.0
    %814 = vmatmul.mubr.f32.gmra.mxu0 %v690
    %v815 = vpop.f32.mrf.mxu0
    %v816 = vadd.f32 0.0, %v815
    %v817 = vpop.f32.mrf.mxu0
    %818 = vmatprep.mubr.f32.mxu0 0.0
    %819 = vmatmul.mubr.f32.gmra.mxu0 %v693
    %v820 = vpop.f32.mrf.mxu0
    %v821 = vadd.f32 0.0, %v820
    %v822 = vpop.f32.mrf.mxu0
    %823 = vmatprep.mubr.f32.mxu0 0.0
    %824 = vmatmul.mubr.f32.gmra.mxu0 %v696
    %v825 = vpop.f32.mrf.mxu0
    %v826 = vadd.f32 0.0, %v825
    %v827 = vpop.f32.mrf.mxu0
    %828 = vmatprep.mubr.f32.mxu0 0.0
    %829 = vmatmul.mubr.f32.gmra.mxu0 %v699
    %v830 = vpop.f32.mrf.mxu0
    %v831 = vadd.f32 0.0, %v830
    %v832 = vpop.f32.mrf.mxu0
    %833 = vmatprep.mubr.f32.mxu0 0.0
    %834 = vmatmul.mubr.f32.gmra.mxu0 %v702
    %v835 = vpop.f32.mrf.mxu0
    %v836 = vadd.f32 0.0, %v835
    %v837 = vpop.f32.mrf.mxu0
    %838 = vmatprep.mubr.f32.mxu0 0.0
    %839 = vmatmul.mubr.f32.gmra.mxu0 %v705
    %v840 = vpop.f32.mrf.mxu0
    %v841 = vadd.f32 0.0, %v840
    %v842 = vpop.f32.mrf.mxu0
    %843 = vmatprep.mubr.f32.mxu0 0.0
    %844 = vmatmul.mubr.f32.gmra.mxu0 %v708
    %v845 = vpop.f32.mrf.mxu0
    %v846 = vadd.f32 0.0, %v845
    %v847 = vpop.f32.mrf.mxu0
    %848 = vmatprep.mubr.f32.mxu0 0.0
    %849 = vmatmul.mubr.f32.gmra.mxu0 %v711
    %v850 = vpop.f32.mrf.mxu0
    %v851 = vadd.f32 0.0, %v850
    %v852 = vpop.f32.mrf.mxu0
    %853 = vmatprep.mubr.f32.mxu0 0.0
    %854 = vmatmul.mubr.f32.gmra.mxu0 %v714
    %v855 = vpop.f32.mrf.mxu0
    %v856 = vadd.f32 0.0, %v855
    %v857 = vpop.f32.mrf.mxu0
    %858 = vmatprep.mubr.f32.mxu0 0.0
    %859 = vmatmul.mubr.f32.gmra.mxu0 %v717
    %v860 = vpop.f32.mrf.mxu0
    %v861 = vadd.f32 0.0, %v860
    %v862 = vpop.f32.mrf.mxu0
    %863 = vdwg.mxu0
    %v864 = vmul.f32 %v786, %v76
    %v865 = vmul.f32 %v791, %v77
    %v866 = vmul.f32 %v796, %v78
    %v867 = vmul.f32 %v801, %v79
    %v868 = vmul.f32 %v806, %v80
    %v869 = vmul.f32 %v811, %v81
    %v870 = vmul.f32 %v816, %v82
    %v871 = vmul.f32 %v821, %v83
    %v872 = vmul.f32 %v826, %v84
    %v873 = vmul.f32 %v831, %v85
    %v874 = vmul.f32 %v836, %v86
    %v875 = vmul.f32 %v841, %v87
    %v876 = vmul.f32 %v846, %v88
    %v877 = vmul.f32 %v851, %v89
    %v878 = vmul.f32 %v856, %v90
    %v879 = vmul.f32 %v861, %v91
    %880 = vmatprep.subr.mxu0 0.0
    %881 = vmatpush1.msra.mxu0 %v879
    %882 = vmatprep.subr.mxu0 0.0
    %883 = vmatpush1.msra.mxu0 %v878
    %884 = vmatprep.subr.mxu0 0.0
    %885 = vmatpush1.msra.mxu0 %v877
    %886 = vmatprep.subr.mxu0 0.0
    %887 = vmatpush1.msra.mxu0 %v876
    %888 = vmatprep.subr.mxu0 0.0
    %889 = vmatpush1.msra.mxu0 %v875
    %890 = vmatprep.subr.mxu0 0.0
    %891 = vmatpush1.msra.mxu0 %v874
    %892 = vmatprep.subr.mxu0 0.0
    %893 = vmatpush1.msra.mxu0 %v873
    %894 = vmatprep.subr.mxu0 0.0
    %895 = vmatpush1.msra.mxu0 %v872
    %896 = vmatprep.subr.mxu0 0.0
    %897 = vmatpush1.msra.mxu0 %v871
    %898 = vmatprep.subr.mxu0 0.0
    %899 = vmatpush1.msra.mxu0 %v870
    %900 = vmatprep.subr.mxu0 0.0
    %901 = vmatpush1.msra.mxu0 %v869
    %902 = vmatprep.subr.mxu0 0.0
    %903 = vmatpush1.msra.mxu0 %v868
    %904 = vmatprep.subr.mxu0 0.0
    %905 = vmatpush1.msra.mxu0 %v867
    %906 = vmatprep.subr.mxu0 0.0
    %907 = vmatpush1.msra.mxu0 %v866
    %908 = vmatprep.subr.mxu0 0.0
    %909 = vmatpush1.msra.mxu0 %v865
    %910 = vmatprep.subr.mxu0 0.0
    %911 = vmatpush1.msra.mxu0 %v864
    %912 = vmatprep.subr.mxu0 0.0
    %913 = vmatpush2.msra.mxu0 0.0
    %914 = vmatprep.subr.mxu0 0.0
    %915 = vmatpush2.msra.mxu0 0.0
    %916 = vmatprep.subr.mxu0 0.0
    %917 = vmatpush2.msra.mxu0 0.0
    %918 = vmatprep.subr.mxu0 0.0
    %919 = vmatpush2.msra.mxu0 0.0
    %920 = vmatprep.subr.mxu0 0.0
    %921 = vmatpush2.msra.mxu0 0.0
    %922 = vmatprep.subr.mxu0 0.0
    %923 = vmatpush2.msra.mxu0 0.0
    %924 = vmatprep.subr.mxu0 0.0
    %925 = vmatpush2.msra.mxu0 0.0
    %926 = vmatprep.subr.mxu0 0.0
    %927 = vmatpush2.msra.mxu0 0.0
    %928 = vmatprep.subr.mxu0 0.0
    %929 = vmatpush2.msra.mxu0 0.0
    %930 = vmatprep.subr.mxu0 0.0
    %931 = vmatpush2.msra.mxu0 0.0
    %932 = vmatprep.subr.mxu0 0.0
    %933 = vmatpush2.msra.mxu0 0.0
    %934 = vmatprep.subr.mxu0 0.0
    %935 = vmatpush2.msra.mxu0 0.0
    %936 = vmatprep.subr.mxu0 0.0
    %937 = vmatpush2.msra.mxu0 0.0
    %938 = vmatprep.subr.mxu0 0.0
    %939 = vmatpush2.msra.mxu0 0.0
    %940 = vmatprep.subr.mxu0 0.0
    %941 = vmatpush2.msra.mxu0 0.0
    %942 = vmatprep.subr.mxu0 0.0
    %943 = vmatpush2.msra.mxu0 0.0
    %944 = vmatprep.mubr.f32.mxu0 0.0
    %945 = vmatmul.mubr.f32.gmra.mxu0 %v664
    %v946 = vpop.f32.mrf.mxu0
    %v947 = vadd.f32 0.0, %v946
    %v948 = vpop.f32.mrf.mxu0
    %949 = vmatprep.mubr.f32.mxu0 0.0
    %950 = vmatmul.mubr.f32.gmra.mxu0 %v666
    %v951 = vpop.f32.mrf.mxu0
    %v952 = vadd.f32 0.0, %v951
    %v953 = vpop.f32.mrf.mxu0
    %954 = vmatprep.mubr.f32.mxu0 0.0
    %955 = vmatmul.mubr.f32.gmra.mxu0 %v668
    %v956 = vpop.f32.mrf.mxu0
    %v957 = vadd.f32 0.0, %v956
    %v958 = vpop.f32.mrf.mxu0
    %959 = vmatprep.mubr.f32.mxu0 0.0
    %960 = vmatmul.mubr.f32.gmra.mxu0 %v670
    %v961 = vpop.f32.mrf.mxu0
    %v962 = vadd.f32 0.0, %v961
    %v963 = vpop.f32.mrf.mxu0
    %964 = vdwg.mxu0
    %966 = vset.pattern.permute.xlu0 0
    %967 = vperm.xlu0 %966, %v108
    %v968 = vpop.permute.xlu0 %967
    %971 = vset.pattern.permute.xlu0 0
    %972 = vperm.xlu0 %971, %v109
    %v973 = vpop.permute.xlu0 %972
    %976 = vset.pattern.permute.xlu0 0
    %977 = vperm.xlu0 %976, %v110
    %v978 = vpop.permute.xlu0 %977
    %981 = vset.pattern.permute.xlu0 0
    %982 = vperm.xlu0 %981, %v111
    %v983 = vpop.permute.xlu0 %982
    %v985 = vmul.f32 %v947, %v968
    %v986 = vmul.f32 %v952, %v973
    %v987 = vmul.f32 %v957, %v978
    %v988 = vmul.f32 %v962, %v983
    %v989 = vld [vmem:[%s11] sm:$0x1]
    %v991 = vlaneseq
    %v992 = vshrl.u32 %v991, 7
    %v993 = vsub.s32 0, %v992
    %v994 = vrot.slane %v989, %v993
    %v996 = vmul.f32 %v985, %v994
    %v997 = vmul.f32 %v986, %v994
    %v998 = vmul.f32 %v987, %v994
    %v999 = vmul.f32 %v988, %v994
    %v1000 = vld [vmem:[%s12] sm:$0x1]
    %v1002 = vlaneseq
    %v1003 = vshrl.u32 %v1002, 7
    %v1004 = vsub.s32 0, %v1003
    %v1005 = vrot.slane %v1000, %v1004
    %v1007 = vadd.f32 %v996, %v1005
    %v1008 = vadd.f32 %v997, %v1005
    %v1009 = vadd.f32 %v998, %v1005
    %v1010 = vadd.f32 %v999, %v1005
    %vm1011 = vcmp.gt.f32.partialorder %v1007, 0.0
    %vm1012 = vcmp.gt.f32.partialorder %v1008, 0.0
    %vm1013 = vcmp.gt.f32.partialorder %v1009, 0.0
    %vm1014 = vcmp.gt.f32.partialorder %v1010, 0.0
    %v1015 = vmin.f32 %v1007, 0.0
    %v1016 = vmin.f32 %v1008, 0.0
    %v1017 = vmin.f32 %v1009, 0.0
    %v1018 = vmin.f32 %v1010, 0.0
    %v1019 = vmul.f32 %v1015, 1.442695
    %v1020 = vpow.pop %v1019
    %v1021 = vmul.f32 %v1016, 1.442695
    %v1022 = vpow.pop %v1021
    %v1023 = vmul.f32 %v1017, 1.442695
    %v1024 = vpow.pop %v1023
    %v1025 = vmul.f32 %v1018, 1.442695
    %v1026 = vpow.pop %v1025
    %v1027 = vsub.f32 %v1020, 1.0
    %v1028 = vsub.f32 %v1022, 1.0
    %v1029 = vsub.f32 %v1024, 1.0
    %v1030 = vsub.f32 %v1026, 1.0
    %v1031 = vsel %vm1011, %v1007, %v1027
    %v1032 = vsel %vm1012, %v1008, %v1028
    %v1033 = vsel %vm1013, %v1009, %v1029
    %v1034 = vsel %vm1014, %v1010, %v1030
    %v1035 = vadd.f32 %v1031, %v198
    %v1036 = vadd.f32 %v1032, %v203
    %v1037 = vadd.f32 %v1033, %v208
    %v1038 = vadd.f32 %v1034, %v213
    %s1039 = scalar_lea.vmem %s8, 32
    %v1040 = vld [vmem:[%s1039] sm:$0xff]
    %v1041 = vld [vmem:[%s1039 + $0x8] sm:$0xff]
    %v1042 = vld [vmem:[%s1039 + $0x10] sm:$0xff]
    %v1043 = vld [vmem:[%s1039 + $0x18] sm:$0xff]
    %v1045 = vsel %vm220, %v1035, 0
    %v1048 = vsel %vm220, %v1036, 0
    %v1051 = vsel %vm220, %v1037, 0
    %v1054 = vsel %vm220, %v1038, 0
    %1056 = vmatprep.subr.mxu0 0.0
    %1057 = vmatpush1.msra.mxu0 0.0
    %1058 = vmatprep.subr.mxu0 0.0
    %1059 = vmatpush1.msra.mxu0 0.0
    %1060 = vmatprep.subr.mxu0 0.0
    %1061 = vmatpush1.msra.mxu0 0.0
    %1062 = vmatprep.subr.mxu0 0.0
    %1063 = vmatpush1.msra.mxu0 0.0
    %1064 = vmatprep.subr.mxu0 0.0
    %1065 = vmatpush1.msra.mxu0 0.0
    %1066 = vmatprep.subr.mxu0 0.0
    %1067 = vmatpush1.msra.mxu0 0.0
    %1068 = vmatprep.subr.mxu0 0.0
    %1069 = vmatpush1.msra.mxu0 0.0
    %1070 = vmatprep.subr.mxu0 0.0
    %1071 = vmatpush1.msra.mxu0 0.0
    %1072 = vmatprep.subr.mxu0 0.0
    %1073 = vmatpush1.msra.mxu0 0.0
    %1074 = vmatprep.subr.mxu0 0.0
    %1075 = vmatpush1.msra.mxu0 0.0
    %1076 = vmatprep.subr.mxu0 0.0
    %1077 = vmatpush1.msra.mxu0 0.0
    %1078 = vmatprep.subr.mxu0 0.0
    %1079 = vmatpush1.msra.mxu0 0.0
    %1080 = vmatprep.subr.mxu0 0.0
    %1081 = vmatpush1.msra.mxu0 %v1043
    %1082 = vmatprep.subr.mxu0 0.0
    %1083 = vmatpush1.msra.mxu0 %v1042
    %1084 = vmatprep.subr.mxu0 0.0
    %1085 = vmatpush1.msra.mxu0 %v1041
    %1086 = vmatprep.subr.mxu0 0.0
    %1087 = vmatpush1.msra.mxu0 %v1040
    %1088 = vmatprep.subr.mxu0 0.0
    %1089 = vmatpush2.msra.mxu0 0.0
    %1090 = vmatprep.subr.mxu0 0.0
    %1091 = vmatpush2.msra.mxu0 0.0
    %1092 = vmatprep.subr.mxu0 0.0
    %1093 = vmatpush2.msra.mxu0 0.0
    %1094 = vmatprep.subr.mxu0 0.0
    %1095 = vmatpush2.msra.mxu0 0.0
    %1096 = vmatprep.subr.mxu0 0.0
    %1097 = vmatpush2.msra.mxu0 0.0
    %1098 = vmatprep.subr.mxu0 0.0
    %1099 = vmatpush2.msra.mxu0 0.0
    %1100 = vmatprep.subr.mxu0 0.0
    %1101 = vmatpush2.msra.mxu0 0.0
    %1102 = vmatprep.subr.mxu0 0.0
    %1103 = vmatpush2.msra.mxu0 0.0
    %1104 = vmatprep.subr.mxu0 0.0
    %1105 = vmatpush2.msra.mxu0 0.0
    %1106 = vmatprep.subr.mxu0 0.0
    %1107 = vmatpush2.msra.mxu0 0.0
    %1108 = vmatprep.subr.mxu0 0.0
    %1109 = vmatpush2.msra.mxu0 0.0
    %1110 = vmatprep.subr.mxu0 0.0
    %1111 = vmatpush2.msra.mxu0 0.0
    %1112 = vmatprep.subr.mxu0 0.0
    %1113 = vmatpush2.msra.mxu0 0.0
    %1114 = vmatprep.subr.mxu0 0.0
    %1115 = vmatpush2.msra.mxu0 0.0
    %1116 = vmatprep.subr.mxu0 0.0
    %1117 = vmatpush2.msra.mxu0 0.0
    %1118 = vmatprep.subr.mxu0 0.0
    %1119 = vmatpush2.msra.mxu0 0.0
    %1120 = vmatprep.mubr.f32.mxu0 0.0
    %1121 = vmatmul.mubr.f32.gmra.mxu0 %v1045
    %v1122 = vpop.f32.mrf.mxu0
    %v1123 = vadd.f32 0.0, %v1122
    %v1124 = vpop.f32.mrf.mxu0
    %1125 = vmatprep.mubr.f32.mxu0 0.0
    %1126 = vmatmul.mubr.f32.gmra.mxu0 %v1048
    %v1127 = vpop.f32.mrf.mxu0
    %v1128 = vadd.f32 0.0, %v1127
    %v1129 = vpop.f32.mrf.mxu0
    %1130 = vmatprep.mubr.f32.mxu0 0.0
    %1131 = vmatmul.mubr.f32.gmra.mxu0 %v1051
    %v1132 = vpop.f32.mrf.mxu0
    %v1133 = vadd.f32 0.0, %v1132
    %v1134 = vpop.f32.mrf.mxu0
    %1135 = vmatprep.mubr.f32.mxu0 0.0
    %1136 = vmatmul.mubr.f32.gmra.mxu0 %v1054
    %v1137 = vpop.f32.mrf.mxu0
    %v1138 = vadd.f32 0.0, %v1137
    %v1139 = vpop.f32.mrf.mxu0
    %1140 = vdwg.mxu0
    %s1141 = scalar_lea.vmem %s10, 32
    %v1142 = vld [vmem:[%s1141] sm:$0xff]
    %v1143 = vld [vmem:[%s1141 + $0x8] sm:$0xff]
    %v1144 = vld [vmem:[%s1141 + $0x10] sm:$0xff]
    %v1145 = vld [vmem:[%s1141 + $0x18] sm:$0xff]
    %v1147 = vsel %vm220, %v1123, 0
    %v1150 = vsel %vm220, %v1128, 0
    %v1153 = vsel %vm220, %v1133, 0
    %v1156 = vsel %vm220, %v1138, 0
    %1158 = vmatprep.subr.mxu0 0.0
    %1159 = vmatpush1.msra.mxu0 0.0
    %1160 = vmatprep.subr.mxu0 0.0
    %1161 = vmatpush1.msra.mxu0 0.0
    %1162 = vmatprep.subr.mxu0 0.0
    %1163 = vmatpush1.msra.mxu0 0.0
    %1164 = vmatprep.subr.mxu0 0.0
    %1165 = vmatpush1.msra.mxu0 0.0
    %1166 = vmatprep.subr.mxu0 0.0
    %1167 = vmatpush1.msra.mxu0 0.0
    %1168 = vmatprep.subr.mxu0 0.0
    %1169 = vmatpush1.msra.mxu0 0.0
    %1170 = vmatprep.subr.mxu0 0.0
    %1171 = vmatpush1.msra.mxu0 0.0
    %1172 = vmatprep.subr.mxu0 0.0
    %1173 = vmatpush1.msra.mxu0 0.0
    %1174 = vmatprep.subr.mxu0 0.0
    %1175 = vmatpush1.msra.mxu0 0.0
    %1176 = vmatprep.subr.mxu0 0.0
    %1177 = vmatpush1.msra.mxu0 0.0
    %1178 = vmatprep.subr.mxu0 0.0
    %1179 = vmatpush1.msra.mxu0 0.0
    %1180 = vmatprep.subr.mxu0 0.0
    %1181 = vmatpush1.msra.mxu0 0.0
    %1182 = vmatprep.subr.mxu0 0.0
    %1183 = vmatpush1.msra.mxu0 %v1145
    %1184 = vmatprep.subr.mxu0 0.0
    %1185 = vmatpush1.msra.mxu0 %v1144
    %1186 = vmatprep.subr.mxu0 0.0
    %1187 = vmatpush1.msra.mxu0 %v1143
    %1188 = vmatprep.subr.mxu0 0.0
    %1189 = vmatpush1.msra.mxu0 %v1142
    %1190 = vmatprep.subr.mxu0 0.0
    %1191 = vmatpush2.msra.mxu0 0.0
    %1192 = vmatprep.subr.mxu0 0.0
    %1193 = vmatpush2.msra.mxu0 0.0
    %1194 = vmatprep.subr.mxu0 0.0
    %1195 = vmatpush2.msra.mxu0 0.0
    %1196 = vmatprep.subr.mxu0 0.0
    %1197 = vmatpush2.msra.mxu0 0.0
    %1198 = vmatprep.subr.mxu0 0.0
    %1199 = vmatpush2.msra.mxu0 0.0
    %1200 = vmatprep.subr.mxu0 0.0
    %1201 = vmatpush2.msra.mxu0 0.0
    %1202 = vmatprep.subr.mxu0 0.0
    %1203 = vmatpush2.msra.mxu0 0.0
    %1204 = vmatprep.subr.mxu0 0.0
    %1205 = vmatpush2.msra.mxu0 0.0
    %1206 = vmatprep.subr.mxu0 0.0
    %1207 = vmatpush2.msra.mxu0 0.0
    %1208 = vmatprep.subr.mxu0 0.0
    %1209 = vmatpush2.msra.mxu0 0.0
    %1210 = vmatprep.subr.mxu0 0.0
    %1211 = vmatpush2.msra.mxu0 0.0
    %1212 = vmatprep.subr.mxu0 0.0
    %1213 = vmatpush2.msra.mxu0 0.0
    %1214 = vmatprep.subr.mxu0 0.0
    %1215 = vmatpush2.msra.mxu0 0.0
    %1216 = vmatprep.subr.mxu0 0.0
    %1217 = vmatpush2.msra.mxu0 0.0
    %1218 = vmatprep.subr.mxu0 0.0
    %1219 = vmatpush2.msra.mxu0 0.0
    %1220 = vmatprep.subr.mxu0 0.0
    %1221 = vmatpush2.msra.mxu0 0.0
    %1222 = vmatprep.mubr.f32.mxu0 0.0
    %1223 = vmatmul.mubr.f32.gmra.mxu0 %v1147
    %v1224 = vpop.f32.mrf.mxu0
    %v1225 = vadd.f32 0.0, %v1224
    %v1226 = vpop.f32.mrf.mxu0
    %1227 = vmatprep.mubr.f32.mxu0 0.0
    %1228 = vmatmul.mubr.f32.gmra.mxu0 %v1150
    %v1229 = vpop.f32.mrf.mxu0
    %v1230 = vadd.f32 0.0, %v1229
    %v1231 = vpop.f32.mrf.mxu0
    %1232 = vmatprep.mubr.f32.mxu0 0.0
    %1233 = vmatmul.mubr.f32.gmra.mxu0 %v1153
    %v1234 = vpop.f32.mrf.mxu0
    %v1235 = vadd.f32 0.0, %v1234
    %v1236 = vpop.f32.mrf.mxu0
    %1237 = vmatprep.mubr.f32.mxu0 0.0
    %1238 = vmatmul.mubr.f32.gmra.mxu0 %v1156
    %v1239 = vpop.f32.mrf.mxu0
    %v1240 = vadd.f32 0.0, %v1239
    %v1241 = vpop.f32.mrf.mxu0
    %1242 = vdwg.mxu0
    %s1243 = scalar_lea.vmem %s9, 32
    %v1244 = vld [vmem:[%s1243] sm:$0xff]
    %v1245 = vld [vmem:[%s1243 + $0x8] sm:$0xff]
    %v1246 = vld [vmem:[%s1243 + $0x10] sm:$0xff]
    %v1247 = vld [vmem:[%s1243 + $0x18] sm:$0xff]
    %1248 = vmatprep.subr.mxu0 0.0
    %1249 = vmatpush1.msra.mxu0 0.0
    %1250 = vmatprep.subr.mxu0 0.0
    %1251 = vmatpush1.msra.mxu0 0.0
    %1252 = vmatprep.subr.mxu0 0.0
    %1253 = vmatpush1.msra.mxu0 0.0
    %1254 = vmatprep.subr.mxu0 0.0
    %1255 = vmatpush1.msra.mxu0 0.0
    %1256 = vmatprep.subr.mxu0 0.0
    %1257 = vmatpush1.msra.mxu0 0.0
    %1258 = vmatprep.subr.mxu0 0.0
    %1259 = vmatpush1.msra.mxu0 0.0
    %1260 = vmatprep.subr.mxu0 0.0
    %1261 = vmatpush1.msra.mxu0 0.0
    %1262 = vmatprep.subr.mxu0 0.0
    %1263 = vmatpush1.msra.mxu0 0.0
    %1264 = vmatprep.subr.mxu0 0.0
    %1265 = vmatpush1.msra.mxu0 0.0
    %1266 = vmatprep.subr.mxu0 0.0
    %1267 = vmatpush1.msra.mxu0 0.0
    %1268 = vmatprep.subr.mxu0 0.0
    %1269 = vmatpush1.msra.mxu0 0.0
    %1270 = vmatprep.subr.mxu0 0.0
    %1271 = vmatpush1.msra.mxu0 0.0
    %1272 = vmatprep.subr.mxu0 0.0
    %1273 = vmatpush1.msra.mxu0 %v1247
    %1274 = vmatprep.subr.mxu0 0.0
    %1275 = vmatpush1.msra.mxu0 %v1246
    %1276 = vmatprep.subr.mxu0 0.0
    %1277 = vmatpush1.msra.mxu0 %v1245
    %1278 = vmatprep.subr.mxu0 0.0
    %1279 = vmatpush1.msra.mxu0 %v1244
    %1280 = vmatprep.subr.mxu0 0.0
    %1281 = vmatpush2.msra.mxu0 0.0
    %1282 = vmatprep.subr.mxu0 0.0
    %1283 = vmatpush2.msra.mxu0 0.0
    %1284 = vmatprep.subr.mxu0 0.0
    %1285 = vmatpush2.msra.mxu0 0.0
    %1286 = vmatprep.subr.mxu0 0.0
    %1287 = vmatpush2.msra.mxu0 0.0
    %1288 = vmatprep.subr.mxu0 0.0
    %1289 = vmatpush2.msra.mxu0 0.0
    %1290 = vmatprep.subr.mxu0 0.0
    %1291 = vmatpush2.msra.mxu0 0.0
    %1292 = vmatprep.subr.mxu0 0.0
    %1293 = vmatpush2.msra.mxu0 0.0
    %1294 = vmatprep.subr.mxu0 0.0
    %1295 = vmatpush2.msra.mxu0 0.0
    %1296 = vmatprep.subr.mxu0 0.0
    %1297 = vmatpush2.msra.mxu0 0.0
    %1298 = vmatprep.subr.mxu0 0.0
    %1299 = vmatpush2.msra.mxu0 0.0
    %1300 = vmatprep.subr.mxu0 0.0
    %1301 = vmatpush2.msra.mxu0 0.0
    %1302 = vmatprep.subr.mxu0 0.0
    %1303 = vmatpush2.msra.mxu0 0.0
    %1304 = vmatprep.subr.mxu0 0.0
    %1305 = vmatpush2.msra.mxu0 0.0
    %1306 = vmatprep.subr.mxu0 0.0
    %1307 = vmatpush2.msra.mxu0 0.0
    %1308 = vmatprep.subr.mxu0 0.0
    %1309 = vmatpush2.msra.mxu0 0.0
    %1310 = vmatprep.subr.mxu0 0.0
    %1311 = vmatpush2.msra.mxu0 0.0
    %1312 = vmatprep.mubr.f32.mxu0 0.0
    %1313 = vmatmul.mubr.f32.gmra.mxu0 %v1147
    %v1314 = vpop.f32.mrf.mxu0
    %v1315 = vadd.f32 0.0, %v1314
    %v1316 = vpop.f32.mrf.mxu0
    %1317 = vmatprep.mubr.f32.mxu0 0.0
    %1318 = vmatmul.mubr.f32.gmra.mxu0 %v1150
    %v1319 = vpop.f32.mrf.mxu0
    %v1320 = vadd.f32 0.0, %v1319
    %v1321 = vpop.f32.mrf.mxu0
    %1322 = vmatprep.mubr.f32.mxu0 0.0
    %1323 = vmatmul.mubr.f32.gmra.mxu0 %v1153
    %v1324 = vpop.f32.mrf.mxu0
    %v1325 = vadd.f32 0.0, %v1324
    %v1326 = vpop.f32.mrf.mxu0
    %1327 = vmatprep.mubr.f32.mxu0 0.0
    %1328 = vmatmul.mubr.f32.gmra.mxu0 %v1156
    %v1329 = vpop.f32.mrf.mxu0
    %v1330 = vadd.f32 0.0, %v1329
    %v1331 = vpop.f32.mrf.mxu0
    %1332 = vdwg.mxu0
    %v1333 = vmul.f32 %v1315, %v56
    %v1334 = vmul.f32 %v1320, %v57
    %v1335 = vmul.f32 %v1325, %v58
    %v1336 = vmul.f32 %v1330, %v59
    %v1337 = vadd.f32 %v1333, %v1334
    %v1338 = vadd.f32 %v1337, %v1335
    %v1339 = vadd.f32 %v1338, %v1336
    %v1340 = vrot.slane %v1339, 4
    %v1341 = vadd.f32 %v1339, %v1340
    %v1342 = vrot.slane %v1341, 2
    %v1343 = vadd.f32 %v1341, %v1342
    %v1344 = vrot.slane %v1343, 1
    %v1345 = vadd.f32 %v1343, %v1344
    %v1346 = vmax.f32 %v1315, %v1320
    %v1347 = vmax.f32 %v1325, %v1330
    %v1348 = vmax.f32 %v1346, %v1347
    %v1349 = vrot.slane %v1348, 4
    %v1350 = vmax.f32 %v1348, %v1349
    %v1351 = vrot.slane %v1350, 2
    %v1352 = vmax.f32 %v1350, %v1351
    %v1353 = vrot.slane %v1352, 1
    %v1354 = vmax.f32 %v1352, %v1353
    %v1355 = vadd.f32 %v1225, %v1345
    %v1356 = vadd.f32 %v1230, %v1345
    %v1357 = vadd.f32 %v1235, %v1345
    %v1358 = vadd.f32 %v1240, %v1345
    %vm1359 = vcmp.gt.f32.partialorder %v1355, 0.0
    %vm1360 = vcmp.gt.f32.partialorder %v1356, 0.0
    %vm1361 = vcmp.gt.f32.partialorder %v1357, 0.0
    %vm1362 = vcmp.gt.f32.partialorder %v1358, 0.0
    %v1363 = vmul.f32 %v1355, 0.2
    %v1364 = vmul.f32 %v1356, 0.2
    %v1365 = vmul.f32 %v1357, 0.2
    %v1366 = vmul.f32 %v1358, 0.2
    %v1367 = vsel %vm1359, %v1355, %v1363
    %v1368 = vsel %vm1360, %v1356, %v1364
    %v1369 = vsel %vm1361, %v1357, %v1365
    %v1370 = vsel %vm1362, %v1358, %v1366
    %v1371 = vadd.f32 %v1225, %v1354
    %v1372 = vadd.f32 %v1230, %v1354
    %v1373 = vadd.f32 %v1235, %v1354
    %v1374 = vadd.f32 %v1240, %v1354
    %vm1375 = vcmp.gt.f32.partialorder %v1371, 0.0
    %vm1376 = vcmp.gt.f32.partialorder %v1372, 0.0
    %vm1377 = vcmp.gt.f32.partialorder %v1373, 0.0
    %vm1378 = vcmp.gt.f32.partialorder %v1374, 0.0
    %v1379 = vmul.f32 %v1371, 0.2
    %v1380 = vmul.f32 %v1372, 0.2
    %v1381 = vmul.f32 %v1373, 0.2
    %v1382 = vmul.f32 %v1374, 0.2
    %v1383 = vsel %vm1375, %v1371, %v1379
    %v1384 = vsel %vm1376, %v1372, %v1380
    %v1385 = vsel %vm1377, %v1373, %v1381
    %v1386 = vsel %vm1378, %v1374, %v1382
    %v1387 = vadd.f32 %v1367, %v52
    %v1388 = vadd.f32 %v1368, %v53
    %v1389 = vadd.f32 %v1369, %v54
    %v1390 = vadd.f32 %v1370, %v55
    %v1391 = vsub.f32 %v1387, %v1383
    %v1392 = vsub.f32 %v1388, %v1384
    %v1393 = vsub.f32 %v1389, %v1385
    %v1394 = vsub.f32 %v1390, %v1386
    %v1395 = vmul.f32 %v1391, 1.442695
    %v1396 = vpow.pop %v1395
    %v1397 = vmul.f32 %v1392, 1.442695
    %v1398 = vpow.pop %v1397
    %v1399 = vmul.f32 %v1393, 1.442695
    %v1400 = vpow.pop %v1399
    %v1401 = vmul.f32 %v1394, 1.442695
    %v1402 = vpow.pop %v1401
    %1403 = vmatprep.subr.mxu0 0.0
    %1404 = vmatpush1.msra.mxu0 %v107
    %1405 = vmatprep.subr.mxu0 0.0
    %1406 = vmatpush1.msra.mxu0 %v106
    %1407 = vmatprep.subr.mxu0 0.0
    %1408 = vmatpush1.msra.mxu0 %v105
    %1409 = vmatprep.subr.mxu0 0.0
    %1410 = vmatpush1.msra.mxu0 %v104
    %1411 = vmatprep.subr.mxu0 0.0
    %1412 = vmatpush1.msra.mxu0 %v103
    %1413 = vmatprep.subr.mxu0 0.0
    %1414 = vmatpush1.msra.mxu0 %v102
    %1415 = vmatprep.subr.mxu0 0.0
    %1416 = vmatpush1.msra.mxu0 %v101
    %1417 = vmatprep.subr.mxu0 0.0
    %1418 = vmatpush1.msra.mxu0 %v100
    %1419 = vmatprep.subr.mxu0 0.0
    %1420 = vmatpush1.msra.mxu0 %v99
    %1421 = vmatprep.subr.mxu0 0.0
    %1422 = vmatpush1.msra.mxu0 %v98
    %1423 = vmatprep.subr.mxu0 0.0
    %1424 = vmatpush1.msra.mxu0 %v97
    %1425 = vmatprep.subr.mxu0 0.0
    %1426 = vmatpush1.msra.mxu0 %v96
    %1427 = vmatprep.subr.mxu0 0.0
    %1428 = vmatpush1.msra.mxu0 %v95
    %1429 = vmatprep.subr.mxu0 0.0
    %1430 = vmatpush1.msra.mxu0 %v94
    %1431 = vmatprep.subr.mxu0 0.0
    %1432 = vmatpush1.msra.mxu0 %v93
    %1433 = vmatprep.subr.mxu0 0.0
    %1434 = vmatpush1.msra.mxu0 %v92
    %1435 = vmatprep.subr.mxu0 0.0
    %1436 = vmatpush2.msra.mxu0 0.0
    %1437 = vmatprep.subr.mxu0 0.0
    %1438 = vmatpush2.msra.mxu0 0.0
    %1439 = vmatprep.subr.mxu0 0.0
    %1440 = vmatpush2.msra.mxu0 0.0
    %1441 = vmatprep.subr.mxu0 0.0
    %1442 = vmatpush2.msra.mxu0 0.0
    %1443 = vmatprep.subr.mxu0 0.0
    %1444 = vmatpush2.msra.mxu0 0.0
    %1445 = vmatprep.subr.mxu0 0.0
    %1446 = vmatpush2.msra.mxu0 0.0
    %1447 = vmatprep.subr.mxu0 0.0
    %1448 = vmatpush2.msra.mxu0 0.0
    %1449 = vmatprep.subr.mxu0 0.0
    %1450 = vmatpush2.msra.mxu0 0.0
    %1451 = vmatprep.subr.mxu0 0.0
    %1452 = vmatpush2.msra.mxu0 0.0
    %1453 = vmatprep.subr.mxu0 0.0
    %1454 = vmatpush2.msra.mxu0 0.0
    %1455 = vmatprep.subr.mxu0 0.0
    %1456 = vmatpush2.msra.mxu0 0.0
    %1457 = vmatprep.subr.mxu0 0.0
    %1458 = vmatpush2.msra.mxu0 0.0
    %1459 = vmatprep.subr.mxu0 0.0
    %1460 = vmatpush2.msra.mxu0 0.0
    %1461 = vmatprep.subr.mxu0 0.0
    %1462 = vmatpush2.msra.mxu0 0.0
    %1463 = vmatprep.subr.mxu0 0.0
    %1464 = vmatpush2.msra.mxu0 0.0
    %1465 = vmatprep.subr.mxu0 0.0
    %1466 = vmatpush2.msra.mxu0 0.0
    %1467 = vmatprep.mubr.f32.mxu0 0.0
    %1468 = vmatmul.mubr.f32.gmra.mxu0 %v1396
    %v1469 = vpop.f32.mrf.mxu0
    %v1470 = vadd.f32 0.0, %v1469
    %v1471 = vpop.f32.mrf.mxu0
    %1472 = vmatprep.mubr.f32.mxu0 0.0
    %1473 = vmatmul.mubr.f32.gmra.mxu0 %v1398
    %v1474 = vpop.f32.mrf.mxu0
    %v1475 = vadd.f32 0.0, %v1474
    %v1476 = vpop.f32.mrf.mxu0
    %1477 = vmatprep.mubr.f32.mxu0 0.0
    %1478 = vmatmul.mubr.f32.gmra.mxu0 %v1400
    %v1479 = vpop.f32.mrf.mxu0
    %v1480 = vadd.f32 0.0, %v1479
    %v1481 = vpop.f32.mrf.mxu0
    %1482 = vmatprep.mubr.f32.mxu0 0.0
    %1483 = vmatmul.mubr.f32.gmra.mxu0 %v1402
    %v1484 = vpop.f32.mrf.mxu0
    %v1485 = vadd.f32 0.0, %v1484
    %v1486 = vpop.f32.mrf.mxu0
    %1487 = vdwg.mxu0
    %v1488 = vrcp.pop %v1470
    %v1489 = vmul.f32 %v1396, %v1488
    %v1490 = vrcp.pop %v1475
    %v1491 = vmul.f32 %v1398, %v1490
    %v1492 = vrcp.pop %v1480
    %v1493 = vmul.f32 %v1400, %v1492
    %v1494 = vrcp.pop %v1485
    %v1495 = vmul.f32 %v1402, %v1494
    %1496 = vmatprep.subr.mxu0 0.0
    %1497 = vmatpush1.msra.mxu0 0.0
    %1498 = vmatprep.subr.mxu0 0.0
    %1499 = vmatpush1.msra.mxu0 0.0
    %1500 = vmatprep.subr.mxu0 0.0
    %1501 = vmatpush1.msra.mxu0 0.0
    %1502 = vmatprep.subr.mxu0 0.0
    %1503 = vmatpush1.msra.mxu0 0.0
    %1504 = vmatprep.subr.mxu0 0.0
    %1505 = vmatpush1.msra.mxu0 0.0
    %1506 = vmatprep.subr.mxu0 0.0
    %1507 = vmatpush1.msra.mxu0 0.0
    %1508 = vmatprep.subr.mxu0 0.0
    %1509 = vmatpush1.msra.mxu0 0.0
    %1510 = vmatprep.subr.mxu0 0.0
    %1511 = vmatpush1.msra.mxu0 0.0
    %1512 = vmatprep.subr.mxu0 0.0
    %1513 = vmatpush1.msra.mxu0 0.0
    %1514 = vmatprep.subr.mxu0 0.0
    %1515 = vmatpush1.msra.mxu0 0.0
    %1516 = vmatprep.subr.mxu0 0.0
    %1517 = vmatpush1.msra.mxu0 0.0
    %1518 = vmatprep.subr.mxu0 0.0
    %1519 = vmatpush1.msra.mxu0 0.0
    %1520 = vmatprep.subr.mxu0 0.0
    %1521 = vmatpush1.msra.mxu0 %v1138
    %1522 = vmatprep.subr.mxu0 0.0
    %1523 = vmatpush1.msra.mxu0 %v1133
    %1524 = vmatprep.subr.mxu0 0.0
    %1525 = vmatpush1.msra.mxu0 %v1128
    %1526 = vmatprep.subr.mxu0 0.0
    %1527 = vmatpush1.msra.mxu0 %v1123
    %1528 = vmatprep.subr.mxu0 0.0
    %1529 = vmatpush2.msra.mxu0 0.0
    %1530 = vmatprep.subr.mxu0 0.0
    %1531 = vmatpush2.msra.mxu0 0.0
    %1532 = vmatprep.subr.mxu0 0.0
    %1533 = vmatpush2.msra.mxu0 0.0
    %1534 = vmatprep.subr.mxu0 0.0
    %1535 = vmatpush2.msra.mxu0 0.0
    %1536 = vmatprep.subr.mxu0 0.0
    %1537 = vmatpush2.msra.mxu0 0.0
    %1538 = vmatprep.subr.mxu0 0.0
    %1539 = vmatpush2.msra.mxu0 0.0
    %1540 = vmatprep.subr.mxu0 0.0
    %1541 = vmatpush2.msra.mxu0 0.0
    %1542 = vmatprep.subr.mxu0 0.0
    %1543 = vmatpush2.msra.mxu0 0.0
    %1544 = vmatprep.subr.mxu0 0.0
    %1545 = vmatpush2.msra.mxu0 0.0
    %1546 = vmatprep.subr.mxu0 0.0
    %1547 = vmatpush2.msra.mxu0 0.0
    %1548 = vmatprep.subr.mxu0 0.0
    %1549 = vmatpush2.msra.mxu0 0.0
    %1550 = vmatprep.subr.mxu0 0.0
    %1551 = vmatpush2.msra.mxu0 0.0
    %1552 = vmatprep.subr.mxu0 0.0
    %1553 = vmatpush2.msra.mxu0 0.0
    %1554 = vmatprep.subr.mxu0 0.0
    %1555 = vmatpush2.msra.mxu0 0.0
    %1556 = vmatprep.subr.mxu0 0.0
    %1557 = vmatpush2.msra.mxu0 0.0
    %1558 = vmatprep.subr.mxu0 0.0
    %1559 = vmatpush2.msra.mxu0 0.0
    %1560 = vmatprep.mubr.f32.mxu0 0.0
    %1561 = vmatmul.mubr.f32.gmra.mxu0 %v672
    %v1562 = vpop.f32.mrf.mxu0
    %v1563 = vadd.f32 0.0, %v1562
    %v1564 = vpop.f32.mrf.mxu0
    %1565 = vmatprep.mubr.f32.mxu0 0.0
    %1566 = vmatmul.mubr.f32.gmra.mxu0 %v675
    %v1567 = vpop.f32.mrf.mxu0
    %v1568 = vadd.f32 0.0, %v1567
    %v1569 = vpop.f32.mrf.mxu0
    %1570 = vmatprep.mubr.f32.mxu0 0.0
    %1571 = vmatmul.mubr.f32.gmra.mxu0 %v678
    %v1572 = vpop.f32.mrf.mxu0
    %v1573 = vadd.f32 0.0, %v1572
    %v1574 = vpop.f32.mrf.mxu0
    %1575 = vmatprep.mubr.f32.mxu0 0.0
    %1576 = vmatmul.mubr.f32.gmra.mxu0 %v681
    %v1577 = vpop.f32.mrf.mxu0
    %v1578 = vadd.f32 0.0, %v1577
    %v1579 = vpop.f32.mrf.mxu0
    %1580 = vmatprep.mubr.f32.mxu0 0.0
    %1581 = vmatmul.mubr.f32.gmra.mxu0 %v684
    %v1582 = vpop.f32.mrf.mxu0
    %v1583 = vadd.f32 0.0, %v1582
    %v1584 = vpop.f32.mrf.mxu0
    %1585 = vmatprep.mubr.f32.mxu0 0.0
    %1586 = vmatmul.mubr.f32.gmra.mxu0 %v687
    %v1587 = vpop.f32.mrf.mxu0
    %v1588 = vadd.f32 0.0, %v1587
    %v1589 = vpop.f32.mrf.mxu0
    %1590 = vmatprep.mubr.f32.mxu0 0.0
    %1591 = vmatmul.mubr.f32.gmra.mxu0 %v690
    %v1592 = vpop.f32.mrf.mxu0
    %v1593 = vadd.f32 0.0, %v1592
    %v1594 = vpop.f32.mrf.mxu0
    %1595 = vmatprep.mubr.f32.mxu0 0.0
    %1596 = vmatmul.mubr.f32.gmra.mxu0 %v693
    %v1597 = vpop.f32.mrf.mxu0
    %v1598 = vadd.f32 0.0, %v1597
    %v1599 = vpop.f32.mrf.mxu0
    %1600 = vmatprep.mubr.f32.mxu0 0.0
    %1601 = vmatmul.mubr.f32.gmra.mxu0 %v696
    %v1602 = vpop.f32.mrf.mxu0
    %v1603 = vadd.f32 0.0, %v1602
    %v1604 = vpop.f32.mrf.mxu0
    %1605 = vmatprep.mubr.f32.mxu0 0.0
    %1606 = vmatmul.mubr.f32.gmra.mxu0 %v699
    %v1607 = vpop.f32.mrf.mxu0
    %v1608 = vadd.f32 0.0, %v1607
    %v1609 = vpop.f32.mrf.mxu0
    %1610 = vmatprep.mubr.f32.mxu0 0.0
    %1611 = vmatmul.mubr.f32.gmra.mxu0 %v702
    %v1612 = vpop.f32.mrf.mxu0
    %v1613 = vadd.f32 0.0, %v1612
    %v1614 = vpop.f32.mrf.mxu0
    %1615 = vmatprep.mubr.f32.mxu0 0.0
    %1616 = vmatmul.mubr.f32.gmra.mxu0 %v705
    %v1617 = vpop.f32.mrf.mxu0
    %v1618 = vadd.f32 0.0, %v1617
    %v1619 = vpop.f32.mrf.mxu0
    %1620 = vmatprep.mubr.f32.mxu0 0.0
    %1621 = vmatmul.mubr.f32.gmra.mxu0 %v708
    %v1622 = vpop.f32.mrf.mxu0
    %v1623 = vadd.f32 0.0, %v1622
    %v1624 = vpop.f32.mrf.mxu0
    %1625 = vmatprep.mubr.f32.mxu0 0.0
    %1626 = vmatmul.mubr.f32.gmra.mxu0 %v711
    %v1627 = vpop.f32.mrf.mxu0
    %v1628 = vadd.f32 0.0, %v1627
    %v1629 = vpop.f32.mrf.mxu0
    %1630 = vmatprep.mubr.f32.mxu0 0.0
    %1631 = vmatmul.mubr.f32.gmra.mxu0 %v714
    %v1632 = vpop.f32.mrf.mxu0
    %v1633 = vadd.f32 0.0, %v1632
    %v1634 = vpop.f32.mrf.mxu0
    %1635 = vmatprep.mubr.f32.mxu0 0.0
    %1636 = vmatmul.mubr.f32.gmra.mxu0 %v717
    %v1637 = vpop.f32.mrf.mxu0
    %v1638 = vadd.f32 0.0, %v1637
    %v1639 = vpop.f32.mrf.mxu0
    %1640 = vdwg.mxu0
    %v1641 = vmul.f32 %v1563, %v76
    %v1642 = vmul.f32 %v1568, %v77
    %v1643 = vmul.f32 %v1573, %v78
    %v1644 = vmul.f32 %v1578, %v79
    %v1645 = vmul.f32 %v1583, %v80
    %v1646 = vmul.f32 %v1588, %v81
    %v1647 = vmul.f32 %v1593, %v82
    %v1648 = vmul.f32 %v1598, %v83
    %v1649 = vmul.f32 %v1603, %v84
    %v1650 = vmul.f32 %v1608, %v85
    %v1651 = vmul.f32 %v1613, %v86
    %v1652 = vmul.f32 %v1618, %v87
    %v1653 = vmul.f32 %v1623, %v88
    %v1654 = vmul.f32 %v1628, %v89
    %v1655 = vmul.f32 %v1633, %v90
    %v1656 = vmul.f32 %v1638, %v91
    %1657 = vmatprep.subr.mxu0 0.0
    %1658 = vmatpush1.msra.mxu0 %v1656
    %1659 = vmatprep.subr.mxu0 0.0
    %1660 = vmatpush1.msra.mxu0 %v1655
    %1661 = vmatprep.subr.mxu0 0.0
    %1662 = vmatpush1.msra.mxu0 %v1654
    %1663 = vmatprep.subr.mxu0 0.0
    %1664 = vmatpush1.msra.mxu0 %v1653
    %1665 = vmatprep.subr.mxu0 0.0
    %1666 = vmatpush1.msra.mxu0 %v1652
    %1667 = vmatprep.subr.mxu0 0.0
    %1668 = vmatpush1.msra.mxu0 %v1651
    %1669 = vmatprep.subr.mxu0 0.0
    %1670 = vmatpush1.msra.mxu0 %v1650
    %1671 = vmatprep.subr.mxu0 0.0
    %1672 = vmatpush1.msra.mxu0 %v1649
    %1673 = vmatprep.subr.mxu0 0.0
    %1674 = vmatpush1.msra.mxu0 %v1648
    %1675 = vmatprep.subr.mxu0 0.0
    %1676 = vmatpush1.msra.mxu0 %v1647
    %1677 = vmatprep.subr.mxu0 0.0
    %1678 = vmatpush1.msra.mxu0 %v1646
    %1679 = vmatprep.subr.mxu0 0.0
    %1680 = vmatpush1.msra.mxu0 %v1645
    %1681 = vmatprep.subr.mxu0 0.0
    %1682 = vmatpush1.msra.mxu0 %v1644
    %1683 = vmatprep.subr.mxu0 0.0
    %1684 = vmatpush1.msra.mxu0 %v1643
    %1685 = vmatprep.subr.mxu0 0.0
    %1686 = vmatpush1.msra.mxu0 %v1642
    %1687 = vmatprep.subr.mxu0 0.0
    %1688 = vmatpush1.msra.mxu0 %v1641
    %1689 = vmatprep.subr.mxu0 0.0
    %1690 = vmatpush2.msra.mxu0 0.0
    %1691 = vmatprep.subr.mxu0 0.0
    %1692 = vmatpush2.msra.mxu0 0.0
    %1693 = vmatprep.subr.mxu0 0.0
    %1694 = vmatpush2.msra.mxu0 0.0
    %1695 = vmatprep.subr.mxu0 0.0
    %1696 = vmatpush2.msra.mxu0 0.0
    %1697 = vmatprep.subr.mxu0 0.0
    %1698 = vmatpush2.msra.mxu0 0.0
    %1699 = vmatprep.subr.mxu0 0.0
    %1700 = vmatpush2.msra.mxu0 0.0
    %1701 = vmatprep.subr.mxu0 0.0
    %1702 = vmatpush2.msra.mxu0 0.0
    %1703 = vmatprep.subr.mxu0 0.0
    %1704 = vmatpush2.msra.mxu0 0.0
    %1705 = vmatprep.subr.mxu0 0.0
    %1706 = vmatpush2.msra.mxu0 0.0
    %1707 = vmatprep.subr.mxu0 0.0
    %1708 = vmatpush2.msra.mxu0 0.0
    %1709 = vmatprep.subr.mxu0 0.0
    %1710 = vmatpush2.msra.mxu0 0.0
    %1711 = vmatprep.subr.mxu0 0.0
    %1712 = vmatpush2.msra.mxu0 0.0
    %1713 = vmatprep.subr.mxu0 0.0
    %1714 = vmatpush2.msra.mxu0 0.0
    %1715 = vmatprep.subr.mxu0 0.0
    %1716 = vmatpush2.msra.mxu0 0.0
    %1717 = vmatprep.subr.mxu0 0.0
    %1718 = vmatpush2.msra.mxu0 0.0
    %1719 = vmatprep.subr.mxu0 0.0
    %1720 = vmatpush2.msra.mxu0 0.0
    %1721 = vmatprep.mubr.f32.mxu0 0.0
    %1722 = vmatmul.mubr.f32.gmra.mxu0 %v1489
    %v1723 = vpop.f32.mrf.mxu0
    %v1724 = vadd.f32 0.0, %v1723
    %v1725 = vpop.f32.mrf.mxu0
    %1726 = vmatprep.mubr.f32.mxu0 0.0
    %1727 = vmatmul.mubr.f32.gmra.mxu0 %v1491
    %v1728 = vpop.f32.mrf.mxu0
    %v1729 = vadd.f32 0.0, %v1728
    %v1730 = vpop.f32.mrf.mxu0
    %1731 = vmatprep.mubr.f32.mxu0 0.0
    %1732 = vmatmul.mubr.f32.gmra.mxu0 %v1493
    %v1733 = vpop.f32.mrf.mxu0
    %v1734 = vadd.f32 0.0, %v1733
    %v1735 = vpop.f32.mrf.mxu0
    %1736 = vmatprep.mubr.f32.mxu0 0.0
    %1737 = vmatmul.mubr.f32.gmra.mxu0 %v1495
    %v1738 = vpop.f32.mrf.mxu0
    %v1739 = vadd.f32 0.0, %v1738
    %v1740 = vpop.f32.mrf.mxu0
    %1741 = vdwg.mxu0
    %v1742 = vmul.f32 %v1724, %v968
    %v1743 = vmul.f32 %v1729, %v973
    %v1744 = vmul.f32 %v1734, %v978
    %v1745 = vmul.f32 %v1739, %v983
    %s1746 = scalar_lea.vmem %s11, 1
    %v1747 = vld [vmem:[%s1746] sm:$0x1]
    %v1749 = vlaneseq
    %v1750 = vshrl.u32 %v1749, 7
    %v1751 = vsub.s32 0, %v1750
    %v1752 = vrot.slane %v1747, %v1751
    %v1754 = vmul.f32 %v1742, %v1752
    %v1755 = vmul.f32 %v1743, %v1752
    %v1756 = vmul.f32 %v1744, %v1752
    %v1757 = vmul.f32 %v1745, %v1752
    %s1758 = scalar_lea.vmem %s12, 1
    %v1759 = vld [vmem:[%s1758] sm:$0x1]
    %v1761 = vlaneseq
    %v1762 = vshrl.u32 %v1761, 7
    %v1763 = vsub.s32 0, %v1762
    %v1764 = vrot.slane %v1759, %v1763
    %v1766 = vadd.f32 %v1754, %v1764
    %v1767 = vadd.f32 %v1755, %v1764
    %v1768 = vadd.f32 %v1756, %v1764
    %v1769 = vadd.f32 %v1757, %v1764
    %vm1770 = vcmp.gt.f32.partialorder %v1766, 0.0
    %vm1771 = vcmp.gt.f32.partialorder %v1767, 0.0
    %vm1772 = vcmp.gt.f32.partialorder %v1768, 0.0
    %vm1773 = vcmp.gt.f32.partialorder %v1769, 0.0
    %v1774 = vmin.f32 %v1766, 0.0
    %v1775 = vmin.f32 %v1767, 0.0
    %v1776 = vmin.f32 %v1768, 0.0
    %v1777 = vmin.f32 %v1769, 0.0
    %v1778 = vmul.f32 %v1774, 1.442695
    %v1779 = vpow.pop %v1778
    %v1780 = vmul.f32 %v1775, 1.442695
    %v1781 = vpow.pop %v1780
    %v1782 = vmul.f32 %v1776, 1.442695
    %v1783 = vpow.pop %v1782
    %v1784 = vmul.f32 %v1777, 1.442695
    %v1785 = vpow.pop %v1784
    %v1786 = vsub.f32 %v1779, 1.0
    %v1787 = vsub.f32 %v1781, 1.0
    %v1788 = vsub.f32 %v1783, 1.0
    %v1789 = vsub.f32 %v1785, 1.0
    %v1790 = vsel %vm1770, %v1766, %v1786
    %v1791 = vsel %vm1771, %v1767, %v1787
    %v1792 = vsel %vm1772, %v1768, %v1788
    %v1793 = vsel %vm1773, %v1769, %v1789
    %v1794 = vadd.f32 %v1790, %v1035
    %v1795 = vadd.f32 %v1791, %v1036
    %v1796 = vadd.f32 %v1792, %v1037
    %v1797 = vadd.f32 %v1793, %v1038
    %v1798 = vsel %vm220, %v1794, 0.0
    %v1799 = vsel %vm220, %v1795, 0.0
    %v1800 = vadd.f32 %v1798, %v1799
    %v1801 = vsel %vm220, %v1796, 0.0
    %v1802 = vadd.f32 %v1800, %v1801
    %v1803 = vsel %vm220, %v1797, 0.0
    %v1804 = vadd.f32 %v1802, %v1803
    %v1805 = vrot.slane %v1804, 4
    %v1806 = vadd.f32 %v1804, %v1805
    %v1807 = vrot.slane %v1806, 2
    %v1808 = vadd.f32 %v1806, %v1807
    %v1809 = vrot.slane %v1808, 1
    %v1810 = vadd.f32 %v1808, %v1809
    %v1811 = vld [vmem:[%s13] sm:$0xff]
    %v1812 = vld [vmem:[%s13 + $0x8] sm:$0xff]
    %v1813 = vld [vmem:[%s13 + $0x10] sm:$0xff]
    %v1814 = vld [vmem:[%s13 + $0x18] sm:$0xff]
    %s1815 = sld [smem:[#allocation2]]
    %v1816 = vstv %s1815
    %v1818 = vsel %vm220, %v1810, 0
    %1820 = vmatprep.subr.mxu0 0.0
    %1821 = vmatpush1.msra.mxu0 0.0
    %1822 = vmatprep.subr.mxu0 0.0
    %1823 = vmatpush1.msra.mxu0 0.0
    %1824 = vmatprep.subr.mxu0 0.0
    %1825 = vmatpush1.msra.mxu0 0.0
    %1826 = vmatprep.subr.mxu0 0.0
    %1827 = vmatpush1.msra.mxu0 0.0
    %1828 = vmatprep.subr.mxu0 0.0
    %1829 = vmatpush1.msra.mxu0 0.0
    %1830 = vmatprep.subr.mxu0 0.0
    %1831 = vmatpush1.msra.mxu0 0.0
    %1832 = vmatprep.subr.mxu0 0.0
    %1833 = vmatpush1.msra.mxu0 0.0
    %1834 = vmatprep.subr.mxu0 0.0
    %1835 = vmatpush1.msra.mxu0 0.0
    %1836 = vmatprep.subr.mxu0 0.0
    %1837 = vmatpush1.msra.mxu0 0.0
    %1838 = vmatprep.subr.mxu0 0.0
    %1839 = vmatpush1.msra.mxu0 0.0
    %1840 = vmatprep.subr.mxu0 0.0
    %1841 = vmatpush1.msra.mxu0 0.0
    %1842 = vmatprep.subr.mxu0 0.0
    %1843 = vmatpush1.msra.mxu0 0.0
    %1844 = vmatprep.subr.mxu0 0.0
    %1845 = vmatpush1.msra.mxu0 %v1814
    %1846 = vmatprep.subr.mxu0 0.0
    %1847 = vmatpush1.msra.mxu0 %v1813
    %1848 = vmatprep.subr.mxu0 0.0
    %1849 = vmatpush1.msra.mxu0 %v1812
    %1850 = vmatprep.subr.mxu0 0.0
    %1851 = vmatpush1.msra.mxu0 %v1811
    %1852 = vmatprep.subr.mxu0 0.0
    %1853 = vmatpush2.msra.mxu0 0.0
    %1854 = vmatprep.subr.mxu0 0.0
    %1855 = vmatpush2.msra.mxu0 0.0
    %1856 = vmatprep.subr.mxu0 0.0
    %1857 = vmatpush2.msra.mxu0 0.0
    %1858 = vmatprep.subr.mxu0 0.0
    %1859 = vmatpush2.msra.mxu0 0.0
    %1860 = vmatprep.subr.mxu0 0.0
    %1861 = vmatpush2.msra.mxu0 0.0
    %1862 = vmatprep.subr.mxu0 0.0
    %1863 = vmatpush2.msra.mxu0 0.0
    %1864 = vmatprep.subr.mxu0 0.0
    %1865 = vmatpush2.msra.mxu0 0.0
    %1866 = vmatprep.subr.mxu0 0.0
    %1867 = vmatpush2.msra.mxu0 0.0
    %1868 = vmatprep.subr.mxu0 0.0
    %1869 = vmatpush2.msra.mxu0 0.0
    %1870 = vmatprep.subr.mxu0 0.0
    %1871 = vmatpush2.msra.mxu0 0.0
    %1872 = vmatprep.subr.mxu0 0.0
    %1873 = vmatpush2.msra.mxu0 0.0
    %1874 = vmatprep.subr.mxu0 0.0
    %1875 = vmatpush2.msra.mxu0 0.0
    %1876 = vmatprep.subr.mxu0 0.0
    %1877 = vmatpush2.msra.mxu0 0.0
    %1878 = vmatprep.subr.mxu0 0.0
    %1879 = vmatpush2.msra.mxu0 0.0
    %1880 = vmatprep.subr.mxu0 0.0
    %1881 = vmatpush2.msra.mxu0 0.0
    %1882 = vmatprep.subr.mxu0 0.0
    %1883 = vmatpush2.msra.mxu0 0.0
    %1884 = vmatprep.mubr.f32.mxu0 0.0
    %1885 = vmatmul.mubr.f32.gmra.mxu0 %v1818
    %v1886 = vpop.f32.mrf.mxu0
    %v1887 = vadd.f32 %v1816, %v1886
    %v1888 = vpop.f32.mrf.mxu0
    %1889 = vdwg.mxu0
    %vm1890 = vcmask 0
    %1891 = vst.msk [vmem:[#allocation3] sm:$0x1] %vm1890, %v1887
    // Predicated region
    $region62: #{tpu_custom_call.1} parent=1 // pred_check
      _
    $region63: #{tpu_custom_call.1} parent=1 // pred_check_branch
      %1893 = sbr.rel (0) target = $region65
    $region64: #{tpu_custom_call.1} parent=1 // pred_region
      %s1895 = ssub.s32 16, 16
      %1896 = vsyncadd [#allocation4], %s1895
      %s1898 = sshll.u32 [#allocation3], 4
      %s1899 = int_to_ptr.vmem [resolvable:$true] %s1898
      %1901 = dma.vmem_to_hbm [thread:$0]  %s1899, 16, %s15, [#allocation4]
    $region65: #{tpu_custom_call.1} parent=1 // pred_fallthru
      _
    // Predicated region
    $region66: #{tpu_custom_call.1} parent=1 // pred_check
      _
    $region67: #{tpu_custom_call.1} parent=1 // pred_check_branch
      %1903 = sbr.rel (0) target = $region69
    $region68: #{tpu_custom_call.1} parent=1 // pred_region
      %1904 = dma.done [#allocation4], 16
    $region69: #{tpu_custom_call.1} parent=1 // pred_fallthru
      _
    %1905 = vsyncpa [#allocation4], 1

</llo_original>
